<compile_context>
chip_gen: v7x
topology: tpu7x:2x2x1
jax: 0.10.0
libtpu: 0.0.40
codegen_flags: <defaults>
</compile_context>

<pallas_src>
import functools

import jax
import jax.numpy as jnp
from jax.experimental import pallas as pl
from jax.experimental.pallas import tpu as pltpu


# -----------------------------------------------------------------------------
# Kernel: one bidirectional LSTM layer, whole sequence, single grid step.
# -----------------------------------------------------------------------------
def _bilstm_layer_kernel(gx_ref, whh_ref, seq_ref, hN_ref, cN_ref):
    """Fused fwd+bwd LSTM layer recurrence.

    gx_ref : (T, B, 8H)  precomputed input gates + bias, interleaved layout
                         [i_f,i_b, f_f,f_b, g_f,g_b, o_f,o_b]; forward rows use
                         x[t], backward rows use x[T-1-t].
    whh_ref: (2H, 8H)    block-diagonal recurrent weights in the same layout.
    seq_ref: (T, B, 2H)  per-step hidden [h_fwd | h_bwd] (bwd half is in
                         processing order, i.e. time-reversed; fixed up outside).
    hN_ref : (B, 2H)     final hidden [fwd | bwd].
    cN_ref : (B, 2H)     final cell   [fwd | bwd].
    """
    T, B, _ = gx_ref.shape
    H2 = whh_ref.shape[0]            # 2 * H

    w = whh_ref[...]                 # load recurrent weights once (resident)

    def step(t, carry):
        h, c = carry                                                   # (B, 2H)
        gates = gx_ref[t] + jnp.dot(h, w,
                                    preferred_element_type=jnp.float32)  # (B, 8H)
        # Gate blocks are 2H-wide, already in [fwd | bwd] order.
        i_g = jax.nn.sigmoid(gates[:, 0 * H2:1 * H2])
        f_g = jax.nn.sigmoid(gates[:, 1 * H2:2 * H2])
        g_g = jnp.tanh(gates[:, 2 * H2:3 * H2])
        o_g = jax.nn.sigmoid(gates[:, 3 * H2:4 * H2])

        c_new = f_g * c + i_g * g_g
        h_new = o_g * jnp.tanh(c_new)
        seq_ref[t] = h_new.astype(seq_ref.dtype)
        return h_new, c_new

    h0 = jnp.zeros((B, H2), jnp.float32)
    c0 = jnp.zeros((B, H2), jnp.float32)
    h_fin, c_fin = jax.lax.fori_loop(0, T, step, (h0, c0), unroll=True)

    hN_ref[...] = h_fin.astype(hN_ref.dtype)
    cN_ref[...] = c_fin.astype(cN_ref.dtype)


def bilstm_layer(gx, whh_blk):
    """Run one fused bidirectional LSTM layer with a single pallas_call."""
    T, B, G = gx.shape                 # G = 8H
    H2 = whh_blk.shape[0]              # 2H
    return pl.pallas_call(
        _bilstm_layer_kernel,
        out_shape=(
            jax.ShapeDtypeStruct((T, B, H2), jnp.float32),
            jax.ShapeDtypeStruct((B, H2), jnp.float32),
            jax.ShapeDtypeStruct((B, H2), jnp.float32),
        ),
        grid=(1,),                      # whole sequence in one grid step
        in_specs=[
            pl.BlockSpec((T, B, G), lambda i: (0, 0, 0)),   # gx resident in VMEM
            pl.BlockSpec((H2, G), lambda i: (0, 0)),        # W_hh resident
        ],
        out_specs=(
            pl.BlockSpec((T, B, H2), lambda i: (0, 0, 0)),  # bulk writeback
            pl.BlockSpec((B, H2), lambda i: (0, 0)),
            pl.BlockSpec((B, H2), lambda i: (0, 0)),
        ),
        compiler_params=pltpu.CompilerParams(
            dimension_semantics=("arbitrary",),
        ),
    )(gx, whh_blk)


# -----------------------------------------------------------------------------
# Parameters (PyTorch nn.LSTM shapes) and packing into kernel layout.
# -----------------------------------------------------------------------------
def init_encoder_params(key, input_size, hid_dim, n_layers):
    """Synthetic init matching nn.LSTM parameter shapes.

    Returns raw[layer][direction] = (w_ih (4H,Din), w_hh (4H,H), b_ih (4H,), b_hh (4H,)).
    """
    H = hid_dim
    scale = 1.0 / jnp.sqrt(jnp.float32(H))
    params = []
    din = input_size
    for _layer in range(n_layers):
        layer_params = []
        for _direction in range(2):  # forward, backward
            key, k1, k2, k3, k4 = jax.random.split(key, 5)
            w_ih = jax.random.uniform(k1, (4 * H, din), jnp.float32, -scale, scale)
            w_hh = jax.random.uniform(k2, (4 * H, H), jnp.float32, -scale, scale)
            b_ih = jax.random.uniform(k3, (4 * H,), jnp.float32, -scale, scale)
            b_hh = jax.random.uniform(k4, (4 * H,), jnp.float32, -scale, scale)
            layer_params.append((w_ih, w_hh, b_ih, b_hh))
        params.append(layer_params)
        din = 2 * H
    return params


def pack_encoder_params(raw_params):
    """Pack PyTorch-style params into the fused-kernel layout (done once, offline)."""
    packed = []
    for (wf_ih, wf_hh, bf_ih, bf_hh), (wb_ih, wb_hh, bb_ih, bb_hh) in raw_params:
        H = wf_hh.shape[1]
        wih_f_t = wf_ih.T                      # (Din, 4H), cols ordered [i,f,g,o]
        wih_b_t = wb_ih.T
        bias_f = bf_ih + bf_hh                 # (4H,) fused bias
        bias_b = bb_ih + bb_hh

        # Block-diagonal recurrent weights in interleaved-gate layout:
        #   rows:  [h_fwd (H) | h_bwd (H)]
        #   cols:  gate-major, within each gate [fwd (H) | bwd (H)]
        wf = wf_hh.T.reshape(H, 4, H)          # (h_in, gate, h_out)
        wb = wb_hh.T.reshape(H, 4, H)
        blk = jnp.zeros((2, H, 4, 2, H), jnp.float32)  # (dir_row,h_in,gate,dir_col,h_out)
        blk = blk.at[0, :, :, 0, :].set(wf)
        blk = blk.at[1, :, :, 1, :].set(wb)
        whh_blk = blk.reshape(2 * H, 8 * H)

        packed.append((wih_f_t, bias_f, wih_b_t, bias_b, whh_blk))
    return packed


# -----------------------------------------------------------------------------
# Encoder forward (returns (hidden, cell) like the PyTorch module).
# -----------------------------------------------------------------------------
@functools.partial(jax.jit, static_argnames=("input_size",))
def encoder_forward(x, packed_params, *, input_size):
    T, B = x.shape[0], x.shape[1]
    x = x.reshape(T, B, input_size).astype(jnp.float32)

    # TODO(synk): nn.LSTM inter-layer dropout (training-mode only) omitted — eval semantics.
    hiddens, cells = [], []
    layer_in = x
    for wih_f_t, bias_f, wih_b_t, bias_b, whh_blk in packed_params:
        H = whh_blk.shape[0] // 2

        # Hoisted input projection (+ fused bias) for both directions — one
        # well-shaped batched matmul per direction, off the serial path.
        gx_f = jnp.einsum('tbd,dg->tbg', layer_in, wih_f_t) + bias_f          # (T,B,4H)
        gx_b = jnp.einsum('tbd,dg->tbg', jnp.flip(layer_in, axis=0), wih_b_t) + bias_b

        # Interleave per-gate: [i_f,i_b | f_f,f_b | g_f,g_b | o_f,o_b] -> (T,B,8H)
        gx = jnp.stack(
            [gx_f.reshape(T, B, 4, H), gx_b.reshape(T, B, 4, H)], axis=3
        ).reshape(T, B, 8 * H)

        seq_wide, h_fin, c_fin = bilstm_layer(gx, whh_blk)

        hiddens += [h_fin[:, :H], h_fin[:, H:]]   # PyTorch order: fwd then bwd per layer
        cells += [c_fin[:, :H], c_fin[:, H:]]

        # Backward half of seq_wide is in processing order (time-reversed);
        # flip it back and concat -> time-aligned input for the next layer.
        layer_in = jnp.concatenate(
            [seq_wide[:, :, :H], jnp.flip(seq_wide, axis=0)[:, :, H:]], axis=-1)

    hidden = jnp.stack(hiddens, axis=0)   # (n_layers * 2, B, H)
    cell = jnp.stack(cells, axis=0)       # (n_layers * 2, B, H)
    return hidden, cell


# -----------------------------------------------------------------------------
# Pure-JAX reference (direct transcription of nn.LSTM eval semantics).
# -----------------------------------------------------------------------------
def _lstm_ref_direction(x, w_ih, w_hh, b_ih, b_hh, reverse):
    T, B, _ = x.shape
    H = w_hh.shape[1]
    xs = jnp.flip(x, axis=0) if reverse else x

    def step(carry, x_t):
        h, c = carry
        g = x_t @ w_ih.T + b_ih + h @ w_hh.T + b_hh
        i = jax.nn.sigmoid(g[:, :H])
        f = jax.nn.sigmoid(g[:, H:2 * H])
        gg = jnp.tanh(g[:, 2 * H:3 * H])
        o = jax.nn.sigmoid(g[:, 3 * H:])
        c = f * c + i * gg
        h = o * jnp.tanh(c)
        return (h, c), h

    init = (jnp.zeros((B, H), jnp.float32), jnp.zeros((B, H), jnp.float32))
    (hT, cT), seq = jax.lax.scan(step, init, xs)
    if reverse:
        seq = jnp.flip(seq, axis=0)
    return seq, hT, cT


def encoder_reference(x, raw_params, input_size):
    T, B = x.shape[0], x.shape[1]
    x = x.reshape(T, B, input_size).astype(jnp.float32)
    hs, cs = [], []
    layer_in = x
    for layer in raw_params:
        outs = []
        for d, (w_ih, w_hh, b_ih, b_hh) in enumerate(layer):
            seq, h, c = _lstm_ref_direction(layer_in, w_ih, w_hh, b_ih, b_hh,
                                            reverse=(d == 1))
            outs.append(seq)
            hs.append(h)
            cs.append(c)
        layer_in = jnp.concatenate(outs, axis=-1)
    return jnp.stack(hs, axis=0), jnp.stack(cs, axis=0)


if __name__ == "__main__":
    # Small shapes: T=8, B=2, 26 joints x 2 coords -> input_size=52, hid_dim=32.
    T, B = 8, 2
    N_JOINTS, COORDS = 26, 2
    INPUT_SIZE = N_JOINTS * COORDS
    HID_DIM = 32
    N_LAYERS = 2

    key = jax.random.PRNGKey(0)
    key, xk = jax.random.split(key)
    x = jax.random.normal(xk, (T, B, N_JOINTS, COORDS), jnp.float32)

    raw_params = init_encoder_params(key, INPUT_SIZE, HID_DIM, N_LAYERS)
    packed_params = pack_encoder_params(raw_params)

    hidden, cell = encoder_forward(x, packed_params, input_size=INPUT_SIZE)
    jax.block_until_ready((hidden, cell))

    assert hidden.shape == (N_LAYERS * 2, B, HID_DIM), hidden.shape
    assert cell.shape == (N_LAYERS * 2, B, HID_DIM), cell.shape

    # Correctness check against the pure-JAX reference (loose tol: XLA default
    # matmul precision on TPU may use bf16 passes on the reference path).
    hidden_ref, cell_ref = encoder_reference(x, raw_params, INPUT_SIZE)
    assert float(jnp.max(jnp.abs(hidden - hidden_ref))) < 2e-2
    assert float(jnp.max(jnp.abs(cell - cell_ref))) < 2e-2

    print("KERNEL_OK")
</pallas_src>

<mosaic_0001>
module attributes {stable_mosaic.version = 11 : i64} {
  func.func @_bilstm_layer_kernel(%arg0: i32, %arg1: memref<8x2x256xf32, #tpu.memory_space<vmem>>, %arg2: memref<64x256xf32, #tpu.memory_space<vmem>>, %arg3: memref<8x2x64xf32, #tpu.memory_space<vmem>>, %arg4: memref<2x64xf32, #tpu.memory_space<vmem>>, %arg5: memref<2x64xf32, #tpu.memory_space<vmem>>) attributes {dimension_semantics = [#tpu.dimension_semantics<arbitrary>], iteration_bounds = array<i64: 1>, scalar_prefetch = 0 : i64, scratch_operands = 0 : i64, tpu.core_type = #tpu.core_type<tc>, window_params = [{pipeline_mode = #tpu.pipeline_mode<synchronous>, transform_indices = @transform_0, window_bounds = array<i64: 8, 2, 256>}, {pipeline_mode = #tpu.pipeline_mode<synchronous>, transform_indices = @transform_1, window_bounds = array<i64: 64, 256>}, {pipeline_mode = #tpu.pipeline_mode<synchronous>, transform_indices = @transform_2, window_bounds = array<i64: 8, 2, 64>}, {pipeline_mode = #tpu.pipeline_mode<synchronous>, transform_indices = @transform_3, window_bounds = array<i64: 2, 64>}, {pipeline_mode = #tpu.pipeline_mode<synchronous>, transform_indices = @transform_4, window_bounds = array<i64: 2, 64>}]} {
    %c0 = arith.constant 0 : index
    %c0_0 = arith.constant 0 : index
    %0 = vector.load %arg2[%c0, %c0_0] : memref<64x256xf32, #tpu.memory_space<vmem>>, vector<64x256xf32>
    %cst = arith.constant 0.000000e+00 : f32
    %1 = vector.broadcast %cst : f32 to vector<2x64xf32>
    %cst_1 = arith.constant 0.000000e+00 : f32
    %2 = vector.broadcast %cst_1 : f32 to vector<2x64xf32>
    %c0_i32 = arith.constant 0 : i32
    %3 = arith.index_cast %c0_i32 : i32 to index
    %c0_2 = arith.constant 0 : index
    %c0_3 = arith.constant 0 : index
    %4 = vector.load %arg1[%3, %c0_2, %c0_3] : memref<8x2x256xf32, #tpu.memory_space<vmem>>, vector<1x2x256xf32>
    %5 = vector.shape_cast %4 : vector<1x2x256xf32> to vector<2x256xf32>
    %cst_4 = arith.constant dense<0.000000e+00> : vector<2x256xf32>
    %6 = tpu.matmul %1, %0, %cst_4 {dimension_numbers = #tpu.dot_dimension_numbers<[1], [0], [0], [1], [0, 0, 1, 1], [], []>} : vector<2x64xf32>, vector<64x256xf32>, vector<2x256xf32> -> vector<2x256xf32>
    %7 = arith.addf %5, %6 : vector<2x256xf32>
    %8 = vector.extract_strided_slice %7 {offsets = [0, 0], sizes = [2, 64], strides = [1, 1]} : vector<2x256xf32> to vector<2x64xf32>
    %9 = arith.negf %8 : vector<2x64xf32>
    %10 = math.exp %9 : vector<2x64xf32>
    %cst_5 = arith.constant 1.000000e+00 : f32
    %11 = vector.broadcast %cst_5 : f32 to vector<2x64xf32>
    %12 = arith.addf %11, %10 : vector<2x64xf32>
    %13 = arith.divf %11, %12 : vector<2x64xf32>
    %14 = vector.extract_strided_slice %7 {offsets = [0, 64], sizes = [2, 64], strides = [1, 1]} : vector<2x256xf32> to vector<2x64xf32>
    %15 = arith.negf %14 : vector<2x64xf32>
    %16 = math.exp %15 : vector<2x64xf32>
    %cst_6 = arith.constant 1.000000e+00 : f32
    %17 = vector.broadcast %cst_6 : f32 to vector<2x64xf32>
    %18 = arith.addf %17, %16 : vector<2x64xf32>
    %19 = arith.divf %17, %18 : vector<2x64xf32>
    %20 = vector.extract_strided_slice %7 {offsets = [0, 128], sizes = [2, 64], strides = [1, 1]} : vector<2x256xf32> to vector<2x64xf32>
    %21 = math.tanh %20 : vector<2x64xf32>
    %22 = vector.extract_strided_slice %7 {offsets = [0, 192], sizes = [2, 64], strides = [1, 1]} : vector<2x256xf32> to vector<2x64xf32>
    %23 = arith.negf %22 : vector<2x64xf32>
    %24 = math.exp %23 : vector<2x64xf32>
    %cst_7 = arith.constant 1.000000e+00 : f32
    %25 = vector.broadcast %cst_7 : f32 to vector<2x64xf32>
    %26 = arith.addf %25, %24 : vector<2x64xf32>
    %27 = arith.divf %25, %26 : vector<2x64xf32>
    %28 = arith.mulf %19, %2 : vector<2x64xf32>
    %29 = arith.mulf %13, %21 : vector<2x64xf32>
    %30 = arith.addf %28, %29 : vector<2x64xf32>
    %31 = math.tanh %30 : vector<2x64xf32>
    %32 = arith.mulf %27, %31 : vector<2x64xf32>
    %33 = arith.index_cast %c0_i32 : i32 to index
    %c0_8 = arith.constant 0 : index
    %c0_9 = arith.constant 0 : index
    %34 = vector.load %arg3[%33, %c0_8, %c0_9] : memref<8x2x64xf32, #tpu.memory_space<vmem>>, vector<1x2x64xf32>
    %35 = vector.shape_cast %34 : vector<1x2x64xf32> to vector<2x64xf32>
    %36 = vector.shape_cast %32 : vector<2x64xf32> to vector<1x2x64xf32>
    tpu.vector_store %arg3[%33, %c0_8, %c0_9], %36 {strides = array<i32>} : memref<8x2x64xf32, #tpu.memory_space<vmem>>, vector<1x2x64xf32>,
    %c1_i32 = arith.constant 1 : i32
    %37 = arith.index_cast %c1_i32 : i32 to index
    %c0_10 = arith.constant 0 : index
    %c0_11 = arith.constant 0 : index
    %38 = vector.load %arg1[%37, %c0_10, %c0_11] : memref<8x2x256xf32, #tpu.memory_space<vmem>>, vector<1x2x256xf32>
    %39 = vector.shape_cast %38 : vector<1x2x256xf32> to vector<2x256xf32>
    %cst_12 = arith.constant dense<0.000000e+00> : vector<2x256xf32>
    %40 = tpu.matmul %32, %0, %cst_12 {dimension_numbers = #tpu.dot_dimension_numbers<[1], [0], [0], [1], [0, 0, 1, 1], [], []>} : vector<2x64xf32>, vector<64x256xf32>, vector<2x256xf32> -> vector<2x256xf32>
    %41 = arith.addf %39, %40 : vector<2x256xf32>
    %42 = vector.extract_strided_slice %41 {offsets = [0, 0], sizes = [2, 64], strides = [1, 1]} : vector<2x256xf32> to vector<2x64xf32>
    %43 = arith.negf %42 : vector<2x64xf32>
    %44 = math.exp %43 : vector<2x64xf32>
    %cst_13 = arith.constant 1.000000e+00 : f32
    %45 = vector.broadcast %cst_13 : f32 to vector<2x64xf32>
    %46 = arith.addf %45, %44 : vector<2x64xf32>
    %47 = arith.divf %45, %46 : vector<2x64xf32>
    %48 = vector.extract_strided_slice %41 {offsets = [0, 64], sizes = [2, 64], strides = [1, 1]} : vector<2x256xf32> to vector<2x64xf32>
    %49 = arith.negf %48 : vector<2x64xf32>
    %50 = math.exp %49 : vector<2x64xf32>
    %cst_14 = arith.constant 1.000000e+00 : f32
    %51 = vector.broadcast %cst_14 : f32 to vector<2x64xf32>
    %52 = arith.addf %51, %50 : vector<2x64xf32>
    %53 = arith.divf %51, %52 : vector<2x64xf32>
    %54 = vector.extract_strided_slice %41 {offsets = [0, 128], sizes = [2, 64], strides = [1, 1]} : vector<2x256xf32> to vector<2x64xf32>
    %55 = math.tanh %54 : vector<2x64xf32>
    %56 = vector.extract_strided_slice %41 {offsets = [0, 192], sizes = [2, 64], strides = [1, 1]} : vector<2x256xf32> to vector<2x64xf32>
    %57 = arith.negf %56 : vector<2x64xf32>
    %58 = math.exp %57 : vector<2x64xf32>
    %cst_15 = arith.constant 1.000000e+00 : f32
    %59 = vector.broadcast %cst_15 : f32 to vector<2x64xf32>
    %60 = arith.addf %59, %58 : vector<2x64xf32>
    %61 = arith.divf %59, %60 : vector<2x64xf32>
    %62 = arith.mulf %53, %30 : vector<2x64xf32>
    %63 = arith.mulf %47, %55 : vector<2x64xf32>
    %64 = arith.addf %62, %63 : vector<2x64xf32>
    %65 = math.tanh %64 : vector<2x64xf32>
    %66 = arith.mulf %61, %65 : vector<2x64xf32>
    %67 = arith.index_cast %c1_i32 : i32 to index
    %c0_16 = arith.constant 0 : index
    %c0_17 = arith.constant 0 : index
    %68 = vector.load %arg3[%67, %c0_16, %c0_17] : memref<8x2x64xf32, #tpu.memory_space<vmem>>, vector<1x2x64xf32>
    %69 = vector.shape_cast %68 : vector<1x2x64xf32> to vector<2x64xf32>
    %70 = vector.shape_cast %66 : vector<2x64xf32> to vector<1x2x64xf32>
    tpu.vector_store %arg3[%67, %c0_16, %c0_17], %70 {strides = array<i32>} : memref<8x2x64xf32, #tpu.memory_space<vmem>>, vector<1x2x64xf32>,
    %c2_i32 = arith.constant 2 : i32
    %71 = arith.index_cast %c2_i32 : i32 to index
    %c0_18 = arith.constant 0 : index
    %c0_19 = arith.constant 0 : index
    %72 = vector.load %arg1[%71, %c0_18, %c0_19] : memref<8x2x256xf32, #tpu.memory_space<vmem>>, vector<1x2x256xf32>
    %73 = vector.shape_cast %72 : vector<1x2x256xf32> to vector<2x256xf32>
    %cst_20 = arith.constant dense<0.000000e+00> : vector<2x256xf32>
    %74 = tpu.matmul %66, %0, %cst_20 {dimension_numbers = #tpu.dot_dimension_numbers<[1], [0], [0], [1], [0, 0, 1, 1], [], []>} : vector<2x64xf32>, vector<64x256xf32>, vector<2x256xf32> -> vector<2x256xf32>
    %75 = arith.addf %73, %74 : vector<2x256xf32>
    %76 = vector.extract_strided_slice %75 {offsets = [0, 0], sizes = [2, 64], strides = [1, 1]} : vector<2x256xf32> to vector<2x64xf32>
    %77 = arith.negf %76 : vector<2x64xf32>
    %78 = math.exp %77 : vector<2x64xf32>
    %cst_21 = arith.constant 1.000000e+00 : f32
    %79 = vector.broadcast %cst_21 : f32 to vector<2x64xf32>
    %80 = arith.addf %79, %78 : vector<2x64xf32>
    %81 = arith.divf %79, %80 : vector<2x64xf32>
    %82 = vector.extract_strided_slice %75 {offsets = [0, 64], sizes = [2, 64], strides = [1, 1]} : vector<2x256xf32> to vector<2x64xf32>
    %83 = arith.negf %82 : vector<2x64xf32>
    %84 = math.exp %83 : vector<2x64xf32>
    %cst_22 = arith.constant 1.000000e+00 : f32
    %85 = vector.broadcast %cst_22 : f32 to vector<2x64xf32>
    %86 = arith.addf %85, %84 : vector<2x64xf32>
    %87 = arith.divf %85, %86 : vector<2x64xf32>
    %88 = vector.extract_strided_slice %75 {offsets = [0, 128], sizes = [2, 64], strides = [1, 1]} : vector<2x256xf32> to vector<2x64xf32>
    %89 = math.tanh %88 : vector<2x64xf32>
    %90 = vector.extract_strided_slice %75 {offsets = [0, 192], sizes = [2, 64], strides = [1, 1]} : vector<2x256xf32> to vector<2x64xf32>
    %91 = arith.negf %90 : vector<2x64xf32>
    %92 = math.exp %91 : vector<2x64xf32>
    %cst_23 = arith.constant 1.000000e+00 : f32
    %93 = vector.broadcast %cst_23 : f32 to vector<2x64xf32>
    %94 = arith.addf %93, %92 : vector<2x64xf32>
    %95 = arith.divf %93, %94 : vector<2x64xf32>
    %96 = arith.mulf %87, %64 : vector<2x64xf32>
    %97 = arith.mulf %81, %89 : vector<2x64xf32>
    %98 = arith.addf %96, %97 : vector<2x64xf32>
    %99 = math.tanh %98 : vector<2x64xf32>
    %100 = arith.mulf %95, %99 : vector<2x64xf32>
    %101 = arith.index_cast %c2_i32 : i32 to index
    %c0_24 = arith.constant 0 : index
    %c0_25 = arith.constant 0 : index
    %102 = vector.load %arg3[%101, %c0_24, %c0_25] : memref<8x2x64xf32, #tpu.memory_space<vmem>>, vector<1x2x64xf32>
    %103 = vector.shape_cast %102 : vector<1x2x64xf32> to vector<2x64xf32>
    %104 = vector.shape_cast %100 : vector<2x64xf32> to vector<1x2x64xf32>
    tpu.vector_store %arg3[%101, %c0_24, %c0_25], %104 {strides = array<i32>} : memref<8x2x64xf32, #tpu.memory_space<vmem>>, vector<1x2x64xf32>,
    %c3_i32 = arith.constant 3 : i32
    %105 = arith.index_cast %c3_i32 : i32 to index
    %c0_26 = arith.constant 0 : index
    %c0_27 = arith.constant 0 : index
    %106 = vector.load %arg1[%105, %c0_26, %c0_27] : memref<8x2x256xf32, #tpu.memory_space<vmem>>, vector<1x2x256xf32>
    %107 = vector.shape_cast %106 : vector<1x2x256xf32> to vector<2x256xf32>
    %cst_28 = arith.constant dense<0.000000e+00> : vector<2x256xf32>
    %108 = tpu.matmul %100, %0, %cst_28 {dimension_numbers = #tpu.dot_dimension_numbers<[1], [0], [0], [1], [0, 0, 1, 1], [], []>} : vector<2x64xf32>, vector<64x256xf32>, vector<2x256xf32> -> vector<2x256xf32>
    %109 = arith.addf %107, %108 : vector<2x256xf32>
    %110 = vector.extract_strided_slice %109 {offsets = [0, 0], sizes = [2, 64], strides = [1, 1]} : vector<2x256xf32> to vector<2x64xf32>
    %111 = arith.negf %110 : vector<2x64xf32>
    %112 = math.exp %111 : vector<2x64xf32>
    %cst_29 = arith.constant 1.000000e+00 : f32
    %113 = vector.broadcast %cst_29 : f32 to vector<2x64xf32>
    %114 = arith.addf %113, %112 : vector<2x64xf32>
    %115 = arith.divf %113, %114 : vector<2x64xf32>
    %116 = vector.extract_strided_slice %109 {offsets = [0, 64], sizes = [2, 64], strides = [1, 1]} : vector<2x256xf32> to vector<2x64xf32>
    %117 = arith.negf %116 : vector<2x64xf32>
    %118 = math.exp %117 : vector<2x64xf32>
    %cst_30 = arith.constant 1.000000e+00 : f32
    %119 = vector.broadcast %cst_30 : f32 to vector<2x64xf32>
    %120 = arith.addf %119, %118 : vector<2x64xf32>
    %121 = arith.divf %119, %120 : vector<2x64xf32>
    %122 = vector.extract_strided_slice %109 {offsets = [0, 128], sizes = [2, 64], strides = [1, 1]} : vector<2x256xf32> to vector<2x64xf32>
    %123 = math.tanh %122 : vector<2x64xf32>
    %124 = vector.extract_strided_slice %109 {offsets = [0, 192], sizes = [2, 64], strides = [1, 1]} : vector<2x256xf32> to vector<2x64xf32>
    %125 = arith.negf %124 : vector<2x64xf32>
    %126 = math.exp %125 : vector<2x64xf32>
    %cst_31 = arith.constant 1.000000e+00 : f32
    %127 = vector.broadcast %cst_31 : f32 to vector<2x64xf32>
    %128 = arith.addf %127, %126 : vector<2x64xf32>
    %129 = arith.divf %127, %128 : vector<2x64xf32>
    %130 = arith.mulf %121, %98 : vector<2x64xf32>
    %131 = arith.mulf %115, %123 : vector<2x64xf32>
    %132 = arith.addf %130, %131 : vector<2x64xf32>
    %133 = math.tanh %132 : vector<2x64xf32>
    %134 = arith.mulf %129, %133 : vector<2x64xf32>
    %135 = arith.index_cast %c3_i32 : i32 to index
    %c0_32 = arith.constant 0 : index
    %c0_33 = arith.constant 0 : index
    %136 = vector.load %arg3[%135, %c0_32, %c0_33] : memref<8x2x64xf32, #tpu.memory_space<vmem>>, vector<1x2x64xf32>
    %137 = vector.shape_cast %136 : vector<1x2x64xf32> to vector<2x64xf32>
    %138 = vector.shape_cast %134 : vector<2x64xf32> to vector<1x2x64xf32>
    tpu.vector_store %arg3[%135, %c0_32, %c0_33], %138 {strides = array<i32>} : memref<8x2x64xf32, #tpu.memory_space<vmem>>, vector<1x2x64xf32>,
    %c4_i32 = arith.constant 4 : i32
    %139 = arith.index_cast %c4_i32 : i32 to index
    %c0_34 = arith.constant 0 : index
    %c0_35 = arith.constant 0 : index
    %140 = vector.load %arg1[%139, %c0_34, %c0_35] : memref<8x2x256xf32, #tpu.memory_space<vmem>>, vector<1x2x256xf32>
    %141 = vector.shape_cast %140 : vector<1x2x256xf32> to vector<2x256xf32>
    %cst_36 = arith.constant dense<0.000000e+00> : vector<2x256xf32>
    %142 = tpu.matmul %134, %0, %cst_36 {dimension_numbers = #tpu.dot_dimension_numbers<[1], [0], [0], [1], [0, 0, 1, 1], [], []>} : vector<2x64xf32>, vector<64x256xf32>, vector<2x256xf32> -> vector<2x256xf32>
    %143 = arith.addf %141, %142 : vector<2x256xf32>
    %144 = vector.extract_strided_slice %143 {offsets = [0, 0], sizes = [2, 64], strides = [1, 1]} : vector<2x256xf32> to vector<2x64xf32>
    %145 = arith.negf %144 : vector<2x64xf32>
    %146 = math.exp %145 : vector<2x64xf32>
    %cst_37 = arith.constant 1.000000e+00 : f32
    %147 = vector.broadcast %cst_37 : f32 to vector<2x64xf32>
    %148 = arith.addf %147, %146 : vector<2x64xf32>
    %149 = arith.divf %147, %148 : vector<2x64xf32>
    %150 = vector.extract_strided_slice %143 {offsets = [0, 64], sizes = [2, 64], strides = [1, 1]} : vector<2x256xf32> to vector<2x64xf32>
    %151 = arith.negf %150 : vector<2x64xf32>
    %152 = math.exp %151 : vector<2x64xf32>
    %cst_38 = arith.constant 1.000000e+00 : f32
    %153 = vector.broadcast %cst_38 : f32 to vector<2x64xf32>
    %154 = arith.addf %153, %152 : vector<2x64xf32>
    %155 = arith.divf %153, %154 : vector<2x64xf32>
    %156 = vector.extract_strided_slice %143 {offsets = [0, 128], sizes = [2, 64], strides = [1, 1]} : vector<2x256xf32> to vector<2x64xf32>
    %157 = math.tanh %156 : vector<2x64xf32>
    %158 = vector.extract_strided_slice %143 {offsets = [0, 192], sizes = [2, 64], strides = [1, 1]} : vector<2x256xf32> to vector<2x64xf32>
    %159 = arith.negf %158 : vector<2x64xf32>
    %160 = math.exp %159 : vector<2x64xf32>
    %cst_39 = arith.constant 1.000000e+00 : f32
    %161 = vector.broadcast %cst_39 : f32 to vector<2x64xf32>
    %162 = arith.addf %161, %160 : vector<2x64xf32>
    %163 = arith.divf %161, %162 : vector<2x64xf32>
    %164 = arith.mulf %155, %132 : vector<2x64xf32>
    %165 = arith.mulf %149, %157 : vector<2x64xf32>
    %166 = arith.addf %164, %165 : vector<2x64xf32>
    %167 = math.tanh %166 : vector<2x64xf32>
    %168 = arith.mulf %163, %167 : vector<2x64xf32>
    %169 = arith.index_cast %c4_i32 : i32 to index
    %c0_40 = arith.constant 0 : index
    %c0_41 = arith.constant 0 : index
    %170 = vector.load %arg3[%169, %c0_40, %c0_41] : memref<8x2x64xf32, #tpu.memory_space<vmem>>, vector<1x2x64xf32>
    %171 = vector.shape_cast %170 : vector<1x2x64xf32> to vector<2x64xf32>
    %172 = vector.shape_cast %168 : vector<2x64xf32> to vector<1x2x64xf32>
    tpu.vector_store %arg3[%169, %c0_40, %c0_41], %172 {strides = array<i32>} : memref<8x2x64xf32, #tpu.memory_space<vmem>>, vector<1x2x64xf32>,
    %c5_i32 = arith.constant 5 : i32
    %173 = arith.index_cast %c5_i32 : i32 to index
    %c0_42 = arith.constant 0 : index
    %c0_43 = arith.constant 0 : index
    %174 = vector.load %arg1[%173, %c0_42, %c0_43] : memref<8x2x256xf32, #tpu.memory_space<vmem>>, vector<1x2x256xf32>
    %175 = vector.shape_cast %174 : vector<1x2x256xf32> to vector<2x256xf32>
    %cst_44 = arith.constant dense<0.000000e+00> : vector<2x256xf32>
    %176 = tpu.matmul %168, %0, %cst_44 {dimension_numbers = #tpu.dot_dimension_numbers<[1], [0], [0], [1], [0, 0, 1, 1], [], []>} : vector<2x64xf32>, vector<64x256xf32>, vector<2x256xf32> -> vector<2x256xf32>
    %177 = arith.addf %175, %176 : vector<2x256xf32>
    %178 = vector.extract_strided_slice %177 {offsets = [0, 0], sizes = [2, 64], strides = [1, 1]} : vector<2x256xf32> to vector<2x64xf32>
    %179 = arith.negf %178 : vector<2x64xf32>
    %180 = math.exp %179 : vector<2x64xf32>
    %cst_45 = arith.constant 1.000000e+00 : f32
    %181 = vector.broadcast %cst_45 : f32 to vector<2x64xf32>
    %182 = arith.addf %181, %180 : vector<2x64xf32>
    %183 = arith.divf %181, %182 : vector<2x64xf32>
    %184 = vector.extract_strided_slice %177 {offsets = [0, 64], sizes = [2, 64], strides = [1, 1]} : vector<2x256xf32> to vector<2x64xf32>
    %185 = arith.negf %184 : vector<2x64xf32>
    %186 = math.exp %185 : vector<2x64xf32>
    %cst_46 = arith.constant 1.000000e+00 : f32
    %187 = vector.broadcast %cst_46 : f32 to vector<2x64xf32>
    %188 = arith.addf %187, %186 : vector<2x64xf32>
    %189 = arith.divf %187, %188 : vector<2x64xf32>
    %190 = vector.extract_strided_slice %177 {offsets = [0, 128], sizes = [2, 64], strides = [1, 1]} : vector<2x256xf32> to vector<2x64xf32>
    %191 = math.tanh %190 : vector<2x64xf32>
    %192 = vector.extract_strided_slice %177 {offsets = [0, 192], sizes = [2, 64], strides = [1, 1]} : vector<2x256xf32> to vector<2x64xf32>
    %193 = arith.negf %192 : vector<2x64xf32>
    %194 = math.exp %193 : vector<2x64xf32>
    %cst_47 = arith.constant 1.000000e+00 : f32
    %195 = vector.broadcast %cst_47 : f32 to vector<2x64xf32>
    %196 = arith.addf %195, %194 : vector<2x64xf32>
    %197 = arith.divf %195, %196 : vector<2x64xf32>
    %198 = arith.mulf %189, %166 : vector<2x64xf32>
    %199 = arith.mulf %183, %191 : vector<2x64xf32>
    %200 = arith.addf %198, %199 : vector<2x64xf32>
    %201 = math.tanh %200 : vector<2x64xf32>
    %202 = arith.mulf %197, %201 : vector<2x64xf32>
    %203 = arith.index_cast %c5_i32 : i32 to index
    %c0_48 = arith.constant 0 : index
    %c0_49 = arith.constant 0 : index
    %204 = vector.load %arg3[%203, %c0_48, %c0_49] : memref<8x2x64xf32, #tpu.memory_space<vmem>>, vector<1x2x64xf32>
    %205 = vector.shape_cast %204 : vector<1x2x64xf32> to vector<2x64xf32>
    %206 = vector.shape_cast %202 : vector<2x64xf32> to vector<1x2x64xf32>
    tpu.vector_store %arg3[%203, %c0_48, %c0_49], %206 {strides = array<i32>} : memref<8x2x64xf32, #tpu.memory_space<vmem>>, vector<1x2x64xf32>,
    %c6_i32 = arith.constant 6 : i32
    %207 = arith.index_cast %c6_i32 : i32 to index
    %c0_50 = arith.constant 0 : index
    %c0_51 = arith.constant 0 : index
    %208 = vector.load %arg1[%207, %c0_50, %c0_51] : memref<8x2x256xf32, #tpu.memory_space<vmem>>, vector<1x2x256xf32>
    %209 = vector.shape_cast %208 : vector<1x2x256xf32> to vector<2x256xf32>
    %cst_52 = arith.constant dense<0.000000e+00> : vector<2x256xf32>
    %210 = tpu.matmul %202, %0, %cst_52 {dimension_numbers = #tpu.dot_dimension_numbers<[1], [0], [0], [1], [0, 0, 1, 1], [], []>} : vector<2x64xf32>, vector<64x256xf32>, vector<2x256xf32> -> vector<2x256xf32>
    %211 = arith.addf %209, %210 : vector<2x256xf32>
    %212 = vector.extract_strided_slice %211 {offsets = [0, 0], sizes = [2, 64], strides = [1, 1]} : vector<2x256xf32> to vector<2x64xf32>
    %213 = arith.negf %212 : vector<2x64xf32>
    %214 = math.exp %213 : vector<2x64xf32>
    %cst_53 = arith.constant 1.000000e+00 : f32
    %215 = vector.broadcast %cst_53 : f32 to vector<2x64xf32>
    %216 = arith.addf %215, %214 : vector<2x64xf32>
    %217 = arith.divf %215, %216 : vector<2x64xf32>
    %218 = vector.extract_strided_slice %211 {offsets = [0, 64], sizes = [2, 64], strides = [1, 1]} : vector<2x256xf32> to vector<2x64xf32>
    %219 = arith.negf %218 : vector<2x64xf32>
    %220 = math.exp %219 : vector<2x64xf32>
    %cst_54 = arith.constant 1.000000e+00 : f32
    %221 = vector.broadcast %cst_54 : f32 to vector<2x64xf32>
    %222 = arith.addf %221, %220 : vector<2x64xf32>
    %223 = arith.divf %221, %222 : vector<2x64xf32>
    %224 = vector.extract_strided_slice %211 {offsets = [0, 128], sizes = [2, 64], strides = [1, 1]} : vector<2x256xf32> to vector<2x64xf32>
    %225 = math.tanh %224 : vector<2x64xf32>
    %226 = vector.extract_strided_slice %211 {offsets = [0, 192], sizes = [2, 64], strides = [1, 1]} : vector<2x256xf32> to vector<2x64xf32>
    %227 = arith.negf %226 : vector<2x64xf32>
    %228 = math.exp %227 : vector<2x64xf32>
    %cst_55 = arith.constant 1.000000e+00 : f32
    %229 = vector.broadcast %cst_55 : f32 to vector<2x64xf32>
    %230 = arith.addf %229, %228 : vector<2x64xf32>
    %231 = arith.divf %229, %230 : vector<2x64xf32>
    %232 = arith.mulf %223, %200 : vector<2x64xf32>
    %233 = arith.mulf %217, %225 : vector<2x64xf32>
    %234 = arith.addf %232, %233 : vector<2x64xf32>
    %235 = math.tanh %234 : vector<2x64xf32>
    %236 = arith.mulf %231, %235 : vector<2x64xf32>
    %237 = arith.index_cast %c6_i32 : i32 to index
    %c0_56 = arith.constant 0 : index
    %c0_57 = arith.constant 0 : index
    %238 = vector.load %arg3[%237, %c0_56, %c0_57] : memref<8x2x64xf32, #tpu.memory_space<vmem>>, vector<1x2x64xf32>
    %239 = vector.shape_cast %238 : vector<1x2x64xf32> to vector<2x64xf32>
    %240 = vector.shape_cast %236 : vector<2x64xf32> to vector<1x2x64xf32>
    tpu.vector_store %arg3[%237, %c0_56, %c0_57], %240 {strides = array<i32>} : memref<8x2x64xf32, #tpu.memory_space<vmem>>, vector<1x2x64xf32>,
    %c7_i32 = arith.constant 7 : i32
    %241 = arith.index_cast %c7_i32 : i32 to index
    %c0_58 = arith.constant 0 : index
    %c0_59 = arith.constant 0 : index
    %242 = vector.load %arg1[%241, %c0_58, %c0_59] : memref<8x2x256xf32, #tpu.memory_space<vmem>>, vector<1x2x256xf32>
    %243 = vector.shape_cast %242 : vector<1x2x256xf32> to vector<2x256xf32>
    %cst_60 = arith.constant dense<0.000000e+00> : vector<2x256xf32>
    %244 = tpu.matmul %236, %0, %cst_60 {dimension_numbers = #tpu.dot_dimension_numbers<[1], [0], [0], [1], [0, 0, 1, 1], [], []>} : vector<2x64xf32>, vector<64x256xf32>, vector<2x256xf32> -> vector<2x256xf32>
    %245 = arith.addf %243, %244 : vector<2x256xf32>
    %246 = vector.extract_strided_slice %245 {offsets = [0, 0], sizes = [2, 64], strides = [1, 1]} : vector<2x256xf32> to vector<2x64xf32>
    %247 = arith.negf %246 : vector<2x64xf32>
    %248 = math.exp %247 : vector<2x64xf32>
    %cst_61 = arith.constant 1.000000e+00 : f32
    %249 = vector.broadcast %cst_61 : f32 to vector<2x64xf32>
    %250 = arith.addf %249, %248 : vector<2x64xf32>
    %251 = arith.divf %249, %250 : vector<2x64xf32>
    %252 = vector.extract_strided_slice %245 {offsets = [0, 64], sizes = [2, 64], strides = [1, 1]} : vector<2x256xf32> to vector<2x64xf32>
    %253 = arith.negf %252 : vector<2x64xf32>
    %254 = math.exp %253 : vector<2x64xf32>
    %cst_62 = arith.constant 1.000000e+00 : f32
    %255 = vector.broadcast %cst_62 : f32 to vector<2x64xf32>
    %256 = arith.addf %255, %254 : vector<2x64xf32>
    %257 = arith.divf %255, %256 : vector<2x64xf32>
    %258 = vector.extract_strided_slice %245 {offsets = [0, 128], sizes = [2, 64], strides = [1, 1]} : vector<2x256xf32> to vector<2x64xf32>
    %259 = math.tanh %258 : vector<2x64xf32>
    %260 = vector.extract_strided_slice %245 {offsets = [0, 192], sizes = [2, 64], strides = [1, 1]} : vector<2x256xf32> to vector<2x64xf32>
    %261 = arith.negf %260 : vector<2x64xf32>
    %262 = math.exp %261 : vector<2x64xf32>
    %cst_63 = arith.constant 1.000000e+00 : f32
    %263 = vector.broadcast %cst_63 : f32 to vector<2x64xf32>
    %264 = arith.addf %263, %262 : vector<2x64xf32>
    %265 = arith.divf %263, %264 : vector<2x64xf32>
    %266 = arith.mulf %257, %234 : vector<2x64xf32>
    %267 = arith.mulf %251, %259 : vector<2x64xf32>
    %268 = arith.addf %266, %267 : vector<2x64xf32>
    %269 = math.tanh %268 : vector<2x64xf32>
    %270 = arith.mulf %265, %269 : vector<2x64xf32>
    %271 = arith.index_cast %c7_i32 : i32 to index
    %c0_64 = arith.constant 0 : index
    %c0_65 = arith.constant 0 : index
    %272 = vector.load %arg3[%271, %c0_64, %c0_65] : memref<8x2x64xf32, #tpu.memory_space<vmem>>, vector<1x2x64xf32>
    %273 = vector.shape_cast %272 : vector<1x2x64xf32> to vector<2x64xf32>
    %274 = vector.shape_cast %270 : vector<2x64xf32> to vector<1x2x64xf32>
    tpu.vector_store %arg3[%271, %c0_64, %c0_65], %274 {strides = array<i32>} : memref<8x2x64xf32, #tpu.memory_space<vmem>>, vector<1x2x64xf32>,
    %c8_i32 = arith.constant 8 : i32
    %c0_66 = arith.constant 0 : index
    %c0_67 = arith.constant 0 : index
    %275 = vector.load %arg4[%c0_66, %c0_67] : memref<2x64xf32, #tpu.memory_space<vmem>>, vector<2x64xf32>
    tpu.vector_store %arg4[%c0_66, %c0_67], %270 {strides = array<i32>} : memref<2x64xf32, #tpu.memory_space<vmem>>, vector<2x64xf32>,
    %c0_68 = arith.constant 0 : index
    %c0_69 = arith.constant 0 : index
    %276 = vector.load %arg5[%c0_68, %c0_69] : memref<2x64xf32, #tpu.memory_space<vmem>>, vector<2x64xf32>
    tpu.vector_store %arg5[%c0_68, %c0_69], %268 {strides = array<i32>} : memref<2x64xf32, #tpu.memory_space<vmem>>, vector<2x64xf32>,
    return
  }
  func.func @transform_0(%arg0: i32) -> (i32, i32, i32) {
    %c0_i32 = arith.constant 0 : i32
    %c0_i32_0 = arith.constant 0 : i32
    %c0_i32_1 = arith.constant 0 : i32
    %c0_i32_2 = arith.constant 0 : i32
    return %c0_i32, %c0_i32_0, %c0_i32_1 : i32, i32, i32
  }
  func.func @transform_1(%arg0: i32) -> (i32, i32) {
    %c0_i32 = arith.constant 0 : i32
    %c0_i32_0 = arith.constant 0 : i32
    %c0_i32_1 = arith.constant 0 : i32
    return %c0_i32, %c0_i32_0 : i32, i32
  }
  func.func @transform_2(%arg0: i32) -> (i32, i32, i32) {
    %c0_i32 = arith.constant 0 : i32
    %c0_i32_0 = arith.constant 0 : i32
    %c0_i32_1 = arith.constant 0 : i32
    %c0_i32_2 = arith.constant 0 : i32
    return %c0_i32, %c0_i32_0, %c0_i32_1 : i32, i32, i32
  }
  func.func @transform_3(%arg0: i32) -> (i32, i32) {
    %c0_i32 = arith.constant 0 : i32
    %c0_i32_0 = arith.constant 0 : i32
    %c0_i32_1 = arith.constant 0 : i32
    return %c0_i32, %c0_i32_0 : i32, i32
  }
  func.func @transform_4(%arg0: i32) -> (i32, i32) {
    %c0_i32 = arith.constant 0 : i32
    %c0_i32_0 = arith.constant 0 : i32
    %c0_i32_1 = arith.constant 0 : i32
    return %c0_i32, %c0_i32_0 : i32, i32
  }
}

module attributes {stable_mosaic.version = 11 : i64} {
  func.func @_bilstm_layer_kernel(%arg0: i32, %arg1: memref<8x2x256xf32, #tpu.memory_space<vmem>>, %arg2: memref<64x256xf32, #tpu.memory_space<vmem>>, %arg3: memref<8x2x64xf32, #tpu.memory_space<vmem>>, %arg4: memref<2x64xf32, #tpu.memory_space<vmem>>, %arg5: memref<2x64xf32, #tpu.memory_space<vmem>>) attributes {dimension_semantics = [#tpu.dimension_semantics<arbitrary>], iteration_bounds = array<i64: 1>, scalar_prefetch = 0 : i64, scratch_operands = 0 : i64, tpu.core_type = #tpu.core_type<tc>, window_params = [{pipeline_mode = #tpu.pipeline_mode<synchronous>, transform_indices = @transform_0, window_bounds = array<i64: 8, 2, 256>}, {pipeline_mode = #tpu.pipeline_mode<synchronous>, transform_indices = @transform_1, window_bounds = array<i64: 64, 256>}, {pipeline_mode = #tpu.pipeline_mode<synchronous>, transform_indices = @transform_2, window_bounds = array<i64: 8, 2, 64>}, {pipeline_mode = #tpu.pipeline_mode<synchronous>, transform_indices = @transform_3, window_bounds = array<i64: 2, 64>}, {pipeline_mode = #tpu.pipeline_mode<synchronous>, transform_indices = @transform_4, window_bounds = array<i64: 2, 64>}]} {
    %c0 = arith.constant 0 : index
    %c0_0 = arith.constant 0 : index
    %0 = vector.load %arg2[%c0, %c0_0] : memref<64x256xf32, #tpu.memory_space<vmem>>, vector<64x256xf32>
    %cst = arith.constant 0.000000e+00 : f32
    %1 = vector.broadcast %cst : f32 to vector<2x64xf32>
    %cst_1 = arith.constant 0.000000e+00 : f32
    %2 = vector.broadcast %cst_1 : f32 to vector<2x64xf32>
    %c0_i32 = arith.constant 0 : i32
    %3 = arith.index_cast %c0_i32 : i32 to index
    %c0_2 = arith.constant 0 : index
    %c0_3 = arith.constant 0 : index
    %4 = vector.load %arg1[%3, %c0_2, %c0_3] : memref<8x2x256xf32, #tpu.memory_space<vmem>>, vector<1x2x256xf32>
    %5 = vector.shape_cast %4 : vector<1x2x256xf32> to vector<2x256xf32>
    %cst_4 = arith.constant dense<0.000000e+00> : vector<2x256xf32>
    %6 = tpu.matmul %1, %0, %cst_4 {dimension_numbers = #tpu.dot_dimension_numbers<[1], [0], [0], [1], [0, 0, 1, 1], [], []>} : vector<2x64xf32>, vector<64x256xf32>, vector<2x256xf32> -> vector<2x256xf32>
    %7 = arith.addf %5, %6 : vector<2x256xf32>
    %8 = vector.extract_strided_slice %7 {offsets = [0, 0], sizes = [2, 64], strides = [1, 1]} : vector<2x256xf32> to vector<2x64xf32>
    %9 = arith.negf %8 : vector<2x64xf32>
    %10 = math.exp %9 : vector<2x64xf32>
    %cst_5 = arith.constant 1.000000e+00 : f32
    %11 = vector.broadcast %cst_5 : f32 to vector<2x64xf32>
    %12 = arith.addf %11, %10 : vector<2x64xf32>
    %13 = arith.divf %11, %12 : vector<2x64xf32>
    %14 = vector.extract_strided_slice %7 {offsets = [0, 64], sizes = [2, 64], strides = [1, 1]} : vector<2x256xf32> to vector<2x64xf32>
    %15 = arith.negf %14 : vector<2x64xf32>
    %16 = math.exp %15 : vector<2x64xf32>
    %cst_6 = arith.constant 1.000000e+00 : f32
    %17 = vector.broadcast %cst_6 : f32 to vector<2x64xf32>
    %18 = arith.addf %17, %16 : vector<2x64xf32>
    %19 = arith.divf %17, %18 : vector<2x64xf32>
    %20 = vector.extract_strided_slice %7 {offsets = [0, 128], sizes = [2, 64], strides = [1, 1]} : vector<2x256xf32> to vector<2x64xf32>
    %21 = math.tanh %20 : vector<2x64xf32>
    %22 = vector.extract_strided_slice %7 {offsets = [0, 192], sizes = [2, 64], strides = [1, 1]} : vector<2x256xf32> to vector<2x64xf32>
    %23 = arith.negf %22 : vector<2x64xf32>
    %24 = math.exp %23 : vector<2x64xf32>
    %cst_7 = arith.constant 1.000000e+00 : f32
    %25 = vector.broadcast %cst_7 : f32 to vector<2x64xf32>
    %26 = arith.addf %25, %24 : vector<2x64xf32>
    %27 = arith.divf %25, %26 : vector<2x64xf32>
    %28 = arith.mulf %19, %2 : vector<2x64xf32>
    %29 = arith.mulf %13, %21 : vector<2x64xf32>
    %30 = arith.addf %28, %29 : vector<2x64xf32>
    %31 = math.tanh %30 : vector<2x64xf32>
    %32 = arith.mulf %27, %31 : vector<2x64xf32>
    %33 = arith.index_cast %c0_i32 : i32 to index
    %c0_8 = arith.constant 0 : index
    %c0_9 = arith.constant 0 : index
    %34 = vector.load %arg3[%33, %c0_8, %c0_9] : memref<8x2x64xf32, #tpu.memory_space<vmem>>, vector<1x2x64xf32>
    %35 = vector.shape_cast %34 : vector<1x2x64xf32> to vector<2x64xf32>
    %36 = vector.shape_cast %32 : vector<2x64xf32> to vector<1x2x64xf32>
    tpu.vector_store %arg3[%33, %c0_8, %c0_9], %36 {strides = array<i32>} : memref<8x2x64xf32, #tpu.memory_space<vmem>>, vector<1x2x64xf32>,
    %c1_i32 = arith.constant 1 : i32
    %37 = arith.index_cast %c1_i32 : i32 to index
    %c0_10 = arith.constant 0 : index
    %c0_11 = arith.constant 0 : index
    %38 = vector.load %arg1[%37, %c0_10, %c0_11] : memref<8x2x256xf32, #tpu.memory_space<vmem>>, vector<1x2x256xf32>
    %39 = vector.shape_cast %38 : vector<1x2x256xf32> to vector<2x256xf32>
    %cst_12 = arith.constant dense<0.000000e+00> : vector<2x256xf32>
    %40 = tpu.matmul %32, %0, %cst_12 {dimension_numbers = #tpu.dot_dimension_numbers<[1], [0], [0], [1], [0, 0, 1, 1], [], []>} : vector<2x64xf32>, vector<64x256xf32>, vector<2x256xf32> -> vector<2x256xf32>
    %41 = arith.addf %39, %40 : vector<2x256xf32>
    %42 = vector.extract_strided_slice %41 {offsets = [0, 0], sizes = [2, 64], strides = [1, 1]} : vector<2x256xf32> to vector<2x64xf32>
    %43 = arith.negf %42 : vector<2x64xf32>
    %44 = math.exp %43 : vector<2x64xf32>
    %cst_13 = arith.constant 1.000000e+00 : f32
    %45 = vector.broadcast %cst_13 : f32 to vector<2x64xf32>
    %46 = arith.addf %45, %44 : vector<2x64xf32>
    %47 = arith.divf %45, %46 : vector<2x64xf32>
    %48 = vector.extract_strided_slice %41 {offsets = [0, 64], sizes = [2, 64], strides = [1, 1]} : vector<2x256xf32> to vector<2x64xf32>
    %49 = arith.negf %48 : vector<2x64xf32>
    %50 = math.exp %49 : vector<2x64xf32>
    %cst_14 = arith.constant 1.000000e+00 : f32
    %51 = vector.broadcast %cst_14 : f32 to vector<2x64xf32>
    %52 = arith.addf %51, %50 : vector<2x64xf32>
    %53 = arith.divf %51, %52 : vector<2x64xf32>
    %54 = vector.extract_strided_slice %41 {offsets = [0, 128], sizes = [2, 64], strides = [1, 1]} : vector<2x256xf32> to vector<2x64xf32>
    %55 = math.tanh %54 : vector<2x64xf32>
    %56 = vector.extract_strided_slice %41 {offsets = [0, 192], sizes = [2, 64], strides = [1, 1]} : vector<2x256xf32> to vector<2x64xf32>
    %57 = arith.negf %56 : vector<2x64xf32>
    %58 = math.exp %57 : vector<2x64xf32>
    %cst_15 = arith.constant 1.000000e+00 : f32
    %59 = vector.broadcast %cst_15 : f32 to vector<2x64xf32>
    %60 = arith.addf %59, %58 : vector<2x64xf32>
    %61 = arith.divf %59, %60 : vector<2x64xf32>
    %62 = arith.mulf %53, %30 : vector<2x64xf32>
    %63 = arith.mulf %47, %55 : vector<2x64xf32>
    %64 = arith.addf %62, %63 : vector<2x64xf32>
    %65 = math.tanh %64 : vector<2x64xf32>
    %66 = arith.mulf %61, %65 : vector<2x64xf32>
    %67 = arith.index_cast %c1_i32 : i32 to index
    %c0_16 = arith.constant 0 : index
    %c0_17 = arith.constant 0 : index
    %68 = vector.load %arg3[%67, %c0_16, %c0_17] : memref<8x2x64xf32, #tpu.memory_space<vmem>>, vector<1x2x64xf32>
    %69 = vector.shape_cast %68 : vector<1x2x64xf32> to vector<2x64xf32>
    %70 = vector.shape_cast %66 : vector<2x64xf32> to vector<1x2x64xf32>
    tpu.vector_store %arg3[%67, %c0_16, %c0_17], %70 {strides = array<i32>} : memref<8x2x64xf32, #tpu.memory_space<vmem>>, vector<1x2x64xf32>,
    %c2_i32 = arith.constant 2 : i32
    %71 = arith.index_cast %c2_i32 : i32 to index
    %c0_18 = arith.constant 0 : index
    %c0_19 = arith.constant 0 : index
    %72 = vector.load %arg1[%71, %c0_18, %c0_19] : memref<8x2x256xf32, #tpu.memory_space<vmem>>, vector<1x2x256xf32>
    %73 = vector.shape_cast %72 : vector<1x2x256xf32> to vector<2x256xf32>
    %cst_20 = arith.constant dense<0.000000e+00> : vector<2x256xf32>
    %74 = tpu.matmul %66, %0, %cst_20 {dimension_numbers = #tpu.dot_dimension_numbers<[1], [0], [0], [1], [0, 0, 1, 1], [], []>} : vector<2x64xf32>, vector<64x256xf32>, vector<2x256xf32> -> vector<2x256xf32>
    %75 = arith.addf %73, %74 : vector<2x256xf32>
    %76 = vector.extract_strided_slice %75 {offsets = [0, 0], sizes = [2, 64], strides = [1, 1]} : vector<2x256xf32> to vector<2x64xf32>
    %77 = arith.negf %76 : vector<2x64xf32>
    %78 = math.exp %77 : vector<2x64xf32>
    %cst_21 = arith.constant 1.000000e+00 : f32
    %79 = vector.broadcast %cst_21 : f32 to vector<2x64xf32>
    %80 = arith.addf %79, %78 : vector<2x64xf32>
    %81 = arith.divf %79, %80 : vector<2x64xf32>
    %82 = vector.extract_strided_slice %75 {offsets = [0, 64], sizes = [2, 64], strides = [1, 1]} : vector<2x256xf32> to vector<2x64xf32>
    %83 = arith.negf %82 : vector<2x64xf32>
    %84 = math.exp %83 : vector<2x64xf32>
    %cst_22 = arith.constant 1.000000e+00 : f32
    %85 = vector.broadcast %cst_22 : f32 to vector<2x64xf32>
    %86 = arith.addf %85, %84 : vector<2x64xf32>
    %87 = arith.divf %85, %86 : vector<2x64xf32>
    %88 = vector.extract_strided_slice %75 {offsets = [0, 128], sizes = [2, 64], strides = [1, 1]} : vector<2x256xf32> to vector<2x64xf32>
    %89 = math.tanh %88 : vector<2x64xf32>
    %90 = vector.extract_strided_slice %75 {offsets = [0, 192], sizes = [2, 64], strides = [1, 1]} : vector<2x256xf32> to vector<2x64xf32>
    %91 = arith.negf %90 : vector<2x64xf32>
    %92 = math.exp %91 : vector<2x64xf32>
    %cst_23 = arith.constant 1.000000e+00 : f32
    %93 = vector.broadcast %cst_23 : f32 to vector<2x64xf32>
    %94 = arith.addf %93, %92 : vector<2x64xf32>
    %95 = arith.divf %93, %94 : vector<2x64xf32>
    %96 = arith.mulf %87, %64 : vector<2x64xf32>
    %97 = arith.mulf %81, %89 : vector<2x64xf32>
    %98 = arith.addf %96, %97 : vector<2x64xf32>
    %99 = math.tanh %98 : vector<2x64xf32>
    %100 = arith.mulf %95, %99 : vector<2x64xf32>
    %101 = arith.index_cast %c2_i32 : i32 to index
    %c0_24 = arith.constant 0 : index
    %c0_25 = arith.constant 0 : index
    %102 = vector.load %arg3[%101, %c0_24, %c0_25] : memref<8x2x64xf32, #tpu.memory_space<vmem>>, vector<1x2x64xf32>
    %103 = vector.shape_cast %102 : vector<1x2x64xf32> to vector<2x64xf32>
    %104 = vector.shape_cast %100 : vector<2x64xf32> to vector<1x2x64xf32>
    tpu.vector_store %arg3[%101, %c0_24, %c0_25], %104 {strides = array<i32>} : memref<8x2x64xf32, #tpu.memory_space<vmem>>, vector<1x2x64xf32>,
    %c3_i32 = arith.constant 3 : i32
    %105 = arith.index_cast %c3_i32 : i32 to index
    %c0_26 = arith.constant 0 : index
    %c0_27 = arith.constant 0 : index
    %106 = vector.load %arg1[%105, %c0_26, %c0_27] : memref<8x2x256xf32, #tpu.memory_space<vmem>>, vector<1x2x256xf32>
    %107 = vector.shape_cast %106 : vector<1x2x256xf32> to vector<2x256xf32>
    %cst_28 = arith.constant dense<0.000000e+00> : vector<2x256xf32>
    %108 = tpu.matmul %100, %0, %cst_28 {dimension_numbers = #tpu.dot_dimension_numbers<[1], [0], [0], [1], [0, 0, 1, 1], [], []>} : vector<2x64xf32>, vector<64x256xf32>, vector<2x256xf32> -> vector<2x256xf32>
    %109 = arith.addf %107, %108 : vector<2x256xf32>
    %110 = vector.extract_strided_slice %109 {offsets = [0, 0], sizes = [2, 64], strides = [1, 1]} : vector<2x256xf32> to vector<2x64xf32>
    %111 = arith.negf %110 : vector<2x64xf32>
    %112 = math.exp %111 : vector<2x64xf32>
    %cst_29 = arith.constant 1.000000e+00 : f32
    %113 = vector.broadcast %cst_29 : f32 to vector<2x64xf32>
    %114 = arith.addf %113, %112 : vector<2x64xf32>
    %115 = arith.divf %113, %114 : vector<2x64xf32>
    %116 = vector.extract_strided_slice %109 {offsets = [0, 64], sizes = [2, 64], strides = [1, 1]} : vector<2x256xf32> to vector<2x64xf32>
    %117 = arith.negf %116 : vector<2x64xf32>
    %118 = math.exp %117 : vector<2x64xf32>
    %cst_30 = arith.constant 1.000000e+00 : f32
    %119 = vector.broadcast %cst_30 : f32 to vector<2x64xf32>
    %120 = arith.addf %119, %118 : vector<2x64xf32>
    %121 = arith.divf %119, %120 : vector<2x64xf32>
    %122 = vector.extract_strided_slice %109 {offsets = [0, 128], sizes = [2, 64], strides = [1, 1]} : vector<2x256xf32> to vector<2x64xf32>
    %123 = math.tanh %122 : vector<2x64xf32>
    %124 = vector.extract_strided_slice %109 {offsets = [0, 192], sizes = [2, 64], strides = [1, 1]} : vector<2x256xf32> to vector<2x64xf32>
    %125 = arith.negf %124 : vector<2x64xf32>
    %126 = math.exp %125 : vector<2x64xf32>
    %cst_31 = arith.constant 1.000000e+00 : f32
    %127 = vector.broadcast %cst_31 : f32 to vector<2x64xf32>
    %128 = arith.addf %127, %126 : vector<2x64xf32>
    %129 = arith.divf %127, %128 : vector<2x64xf32>
    %130 = arith.mulf %121, %98 : vector<2x64xf32>
    %131 = arith.mulf %115, %123 : vector<2x64xf32>
    %132 = arith.addf %130, %131 : vector<2x64xf32>
    %133 = math.tanh %132 : vector<2x64xf32>
    %134 = arith.mulf %129, %133 : vector<2x64xf32>
    %135 = arith.index_cast %c3_i32 : i32 to index
    %c0_32 = arith.constant 0 : index
    %c0_33 = arith.constant 0 : index
    %136 = vector.load %arg3[%135, %c0_32, %c0_33] : memref<8x2x64xf32, #tpu.memory_space<vmem>>, vector<1x2x64xf32>
    %137 = vector.shape_cast %136 : vector<1x2x64xf32> to vector<2x64xf32>
    %138 = vector.shape_cast %134 : vector<2x64xf32> to vector<1x2x64xf32>
    tpu.vector_store %arg3[%135, %c0_32, %c0_33], %138 {strides = array<i32>} : memref<8x2x64xf32, #tpu.memory_space<vmem>>, vector<1x2x64xf32>,
    %c4_i32 = arith.constant 4 : i32
    %139 = arith.index_cast %c4_i32 : i32 to index
    %c0_34 = arith.constant 0 : index
    %c0_35 = arith.constant 0 : index
    %140 = vector.load %arg1[%139, %c0_34, %c0_35] : memref<8x2x256xf32, #tpu.memory_space<vmem>>, vector<1x2x256xf32>
    %141 = vector.shape_cast %140 : vector<1x2x256xf32> to vector<2x256xf32>
    %cst_36 = arith.constant dense<0.000000e+00> : vector<2x256xf32>
    %142 = tpu.matmul %134, %0, %cst_36 {dimension_numbers = #tpu.dot_dimension_numbers<[1], [0], [0], [1], [0, 0, 1, 1], [], []>} : vector<2x64xf32>, vector<64x256xf32>, vector<2x256xf32> -> vector<2x256xf32>
    %143 = arith.addf %141, %142 : vector<2x256xf32>
    %144 = vector.extract_strided_slice %143 {offsets = [0, 0], sizes = [2, 64], strides = [1, 1]} : vector<2x256xf32> to vector<2x64xf32>
    %145 = arith.negf %144 : vector<2x64xf32>
    %146 = math.exp %145 : vector<2x64xf32>
    %cst_37 = arith.constant 1.000000e+00 : f32
    %147 = vector.broadcast %cst_37 : f32 to vector<2x64xf32>
    %148 = arith.addf %147, %146 : vector<2x64xf32>
    %149 = arith.divf %147, %148 : vector<2x64xf32>
    %150 = vector.extract_strided_slice %143 {offsets = [0, 64], sizes = [2, 64], strides = [1, 1]} : vector<2x256xf32> to vector<2x64xf32>
    %151 = arith.negf %150 : vector<2x64xf32>
    %152 = math.exp %151 : vector<2x64xf32>
    %cst_38 = arith.constant 1.000000e+00 : f32
    %153 = vector.broadcast %cst_38 : f32 to vector<2x64xf32>
    %154 = arith.addf %153, %152 : vector<2x64xf32>
    %155 = arith.divf %153, %154 : vector<2x64xf32>
    %156 = vector.extract_strided_slice %143 {offsets = [0, 128], sizes = [2, 64], strides = [1, 1]} : vector<2x256xf32> to vector<2x64xf32>
    %157 = math.tanh %156 : vector<2x64xf32>
    %158 = vector.extract_strided_slice %143 {offsets = [0, 192], sizes = [2, 64], strides = [1, 1]} : vector<2x256xf32> to vector<2x64xf32>
    %159 = arith.negf %158 : vector<2x64xf32>
    %160 = math.exp %159 : vector<2x64xf32>
    %cst_39 = arith.constant 1.000000e+00 : f32
    %161 = vector.broadcast %cst_39 : f32 to vector<2x64xf32>
    %162 = arith.addf %161, %160 : vector<2x64xf32>
    %163 = arith.divf %161, %162 : vector<2x64xf32>
    %164 = arith.mulf %155, %132 : vector<2x64xf32>
    %165 = arith.mulf %149, %157 : vector<2x64xf32>
    %166 = arith.addf %164, %165 : vector<2x64xf32>
    %167 = math.tanh %166 : vector<2x64xf32>
    %168 = arith.mulf %163, %167 : vector<2x64xf32>
    %169 = arith.index_cast %c4_i32 : i32 to index
    %c0_40 = arith.constant 0 : index
    %c0_41 = arith.constant 0 : index
    %170 = vector.load %arg3[%169, %c0_40, %c0_41] : memref<8x2x64xf32, #tpu.memory_space<vmem>>, vector<1x2x64xf32>
    %171 = vector.shape_cast %170 : vector<1x2x64xf32> to vector<2x64xf32>
    %172 = vector.shape_cast %168 : vector<2x64xf32> to vector<1x2x64xf32>
    tpu.vector_store %arg3[%169, %c0_40, %c0_41], %172 {strides = array<i32>} : memref<8x2x64xf32, #tpu.memory_space<vmem>>, vector<1x2x64xf32>,
    %c5_i32 = arith.constant 5 : i32
    %173 = arith.index_cast %c5_i32 : i32 to index
    %c0_42 = arith.constant 0 : index
    %c0_43 = arith.constant 0 : index
    %174 = vector.load %arg1[%173, %c0_42, %c0_43] : memref<8x2x256xf32, #tpu.memory_space<vmem>>, vector<1x2x256xf32>
    %175 = vector.shape_cast %174 : vector<1x2x256xf32> to vector<2x256xf32>
    %cst_44 = arith.constant dense<0.000000e+00> : vector<2x256xf32>
    %176 = tpu.matmul %168, %0, %cst_44 {dimension_numbers = #tpu.dot_dimension_numbers<[1], [0], [0], [1], [0, 0, 1, 1], [], []>} : vector<2x64xf32>, vector<64x256xf32>, vector<2x256xf32> -> vector<2x256xf32>
    %177 = arith.addf %175, %176 : vector<2x256xf32>
    %178 = vector.extract_strided_slice %177 {offsets = [0, 0], sizes = [2, 64], strides = [1, 1]} : vector<2x256xf32> to vector<2x64xf32>
    %179 = arith.negf %178 : vector<2x64xf32>
    %180 = math.exp %179 : vector<2x64xf32>
    %cst_45 = arith.constant 1.000000e+00 : f32
    %181 = vector.broadcast %cst_45 : f32 to vector<2x64xf32>
    %182 = arith.addf %181, %180 : vector<2x64xf32>
    %183 = arith.divf %181, %182 : vector<2x64xf32>
    %184 = vector.extract_strided_slice %177 {offsets = [0, 64], sizes = [2, 64], strides = [1, 1]} : vector<2x256xf32> to vector<2x64xf32>
    %185 = arith.negf %184 : vector<2x64xf32>
    %186 = math.exp %185 : vector<2x64xf32>
    %cst_46 = arith.constant 1.000000e+00 : f32
    %187 = vector.broadcast %cst_46 : f32 to vector<2x64xf32>
    %188 = arith.addf %187, %186 : vector<2x64xf32>
    %189 = arith.divf %187, %188 : vector<2x64xf32>
    %190 = vector.extract_strided_slice %177 {offsets = [0, 128], sizes = [2, 64], strides = [1, 1]} : vector<2x256xf32> to vector<2x64xf32>
    %191 = math.tanh %190 : vector<2x64xf32>
    %192 = vector.extract_strided_slice %177 {offsets = [0, 192], sizes = [2, 64], strides = [1, 1]} : vector<2x256xf32> to vector<2x64xf32>
    %193 = arith.negf %192 : vector<2x64xf32>
    %194 = math.exp %193 : vector<2x64xf32>
    %cst_47 = arith.constant 1.000000e+00 : f32
    %195 = vector.broadcast %cst_47 : f32 to vector<2x64xf32>
    %196 = arith.addf %195, %194 : vector<2x64xf32>
    %197 = arith.divf %195, %196 : vector<2x64xf32>
    %198 = arith.mulf %189, %166 : vector<2x64xf32>
    %199 = arith.mulf %183, %191 : vector<2x64xf32>
    %200 = arith.addf %198, %199 : vector<2x64xf32>
    %201 = math.tanh %200 : vector<2x64xf32>
    %202 = arith.mulf %197, %201 : vector<2x64xf32>
    %203 = arith.index_cast %c5_i32 : i32 to index
    %c0_48 = arith.constant 0 : index
    %c0_49 = arith.constant 0 : index
    %204 = vector.load %arg3[%203, %c0_48, %c0_49] : memref<8x2x64xf32, #tpu.memory_space<vmem>>, vector<1x2x64xf32>
    %205 = vector.shape_cast %204 : vector<1x2x64xf32> to vector<2x64xf32>
    %206 = vector.shape_cast %202 : vector<2x64xf32> to vector<1x2x64xf32>
    tpu.vector_store %arg3[%203, %c0_48, %c0_49], %206 {strides = array<i32>} : memref<8x2x64xf32, #tpu.memory_space<vmem>>, vector<1x2x64xf32>,
    %c6_i32 = arith.constant 6 : i32
    %207 = arith.index_cast %c6_i32 : i32 to index
    %c0_50 = arith.constant 0 : index
    %c0_51 = arith.constant 0 : index
    %208 = vector.load %arg1[%207, %c0_50, %c0_51] : memref<8x2x256xf32, #tpu.memory_space<vmem>>, vector<1x2x256xf32>
    %209 = vector.shape_cast %208 : vector<1x2x256xf32> to vector<2x256xf32>
    %cst_52 = arith.constant dense<0.000000e+00> : vector<2x256xf32>
    %210 = tpu.matmul %202, %0, %cst_52 {dimension_numbers = #tpu.dot_dimension_numbers<[1], [0], [0], [1], [0, 0, 1, 1], [], []>} : vector<2x64xf32>, vector<64x256xf32>, vector<2x256xf32> -> vector<2x256xf32>
    %211 = arith.addf %209, %210 : vector<2x256xf32>
    %212 = vector.extract_strided_slice %211 {offsets = [0, 0], sizes = [2, 64], strides = [1, 1]} : vector<2x256xf32> to vector<2x64xf32>
    %213 = arith.negf %212 : vector<2x64xf32>
    %214 = math.exp %213 : vector<2x64xf32>
    %cst_53 = arith.constant 1.000000e+00 : f32
    %215 = vector.broadcast %cst_53 : f32 to vector<2x64xf32>
    %216 = arith.addf %215, %214 : vector<2x64xf32>
    %217 = arith.divf %215, %216 : vector<2x64xf32>
    %218 = vector.extract_strided_slice %211 {offsets = [0, 64], sizes = [2, 64], strides = [1, 1]} : vector<2x256xf32> to vector<2x64xf32>
    %219 = arith.negf %218 : vector<2x64xf32>
    %220 = math.exp %219 : vector<2x64xf32>
    %cst_54 = arith.constant 1.000000e+00 : f32
    %221 = vector.broadcast %cst_54 : f32 to vector<2x64xf32>
    %222 = arith.addf %221, %220 : vector<2x64xf32>
    %223 = arith.divf %221, %222 : vector<2x64xf32>
    %224 = vector.extract_strided_slice %211 {offsets = [0, 128], sizes = [2, 64], strides = [1, 1]} : vector<2x256xf32> to vector<2x64xf32>
    %225 = math.tanh %224 : vector<2x64xf32>
    %226 = vector.extract_strided_slice %211 {offsets = [0, 192], sizes = [2, 64], strides = [1, 1]} : vector<2x256xf32> to vector<2x64xf32>
    %227 = arith.negf %226 : vector<2x64xf32>
    %228 = math.exp %227 : vector<2x64xf32>
    %cst_55 = arith.constant 1.000000e+00 : f32
    %229 = vector.broadcast %cst_55 : f32 to vector<2x64xf32>
    %230 = arith.addf %229, %228 : vector<2x64xf32>
    %231 = arith.divf %229, %230 : vector<2x64xf32>
    %232 = arith.mulf %223, %200 : vector<2x64xf32>
    %233 = arith.mulf %217, %225 : vector<2x64xf32>
    %234 = arith.addf %232, %233 : vector<2x64xf32>
    %235 = math.tanh %234 : vector<2x64xf32>
    %236 = arith.mulf %231, %235 : vector<2x64xf32>
    %237 = arith.index_cast %c6_i32 : i32 to index
    %c0_56 = arith.constant 0 : index
    %c0_57 = arith.constant 0 : index
    %238 = vector.load %arg3[%237, %c0_56, %c0_57] : memref<8x2x64xf32, #tpu.memory_space<vmem>>, vector<1x2x64xf32>
    %239 = vector.shape_cast %238 : vector<1x2x64xf32> to vector<2x64xf32>
    %240 = vector.shape_cast %236 : vector<2x64xf32> to vector<1x2x64xf32>
    tpu.vector_store %arg3[%237, %c0_56, %c0_57], %240 {strides = array<i32>} : memref<8x2x64xf32, #tpu.memory_space<vmem>>, vector<1x2x64xf32>,
    %c7_i32 = arith.constant 7 : i32
    %241 = arith.index_cast %c7_i32 : i32 to index
    %c0_58 = arith.constant 0 : index
    %c0_59 = arith.constant 0 : index
    %242 = vector.load %arg1[%241, %c0_58, %c0_59] : memref<8x2x256xf32, #tpu.memory_space<vmem>>, vector<1x2x256xf32>
    %243 = vector.shape_cast %242 : vector<1x2x256xf32> to vector<2x256xf32>
    %cst_60 = arith.constant dense<0.000000e+00> : vector<2x256xf32>
    %244 = tpu.matmul %236, %0, %cst_60 {dimension_numbers = #tpu.dot_dimension_numbers<[1], [0], [0], [1], [0, 0, 1, 1], [], []>} : vector<2x64xf32>, vector<64x256xf32>, vector<2x256xf32> -> vector<2x256xf32>
    %245 = arith.addf %243, %244 : vector<2x256xf32>
    %246 = vector.extract_strided_slice %245 {offsets = [0, 0], sizes = [2, 64], strides = [1, 1]} : vector<2x256xf32> to vector<2x64xf32>
    %247 = arith.negf %246 : vector<2x64xf32>
    %248 = math.exp %247 : vector<2x64xf32>
    %cst_61 = arith.constant 1.000000e+00 : f32
    %249 = vector.broadcast %cst_61 : f32 to vector<2x64xf32>
    %250 = arith.addf %249, %248 : vector<2x64xf32>
    %251 = arith.divf %249, %250 : vector<2x64xf32>
    %252 = vector.extract_strided_slice %245 {offsets = [0, 64], sizes = [2, 64], strides = [1, 1]} : vector<2x256xf32> to vector<2x64xf32>
    %253 = arith.negf %252 : vector<2x64xf32>
    %254 = math.exp %253 : vector<2x64xf32>
    %cst_62 = arith.constant 1.000000e+00 : f32
    %255 = vector.broadcast %cst_62 : f32 to vector<2x64xf32>
    %256 = arith.addf %255, %254 : vector<2x64xf32>
    %257 = arith.divf %255, %256 : vector<2x64xf32>
    %258 = vector.extract_strided_slice %245 {offsets = [0, 128], sizes = [2, 64], strides = [1, 1]} : vector<2x256xf32> to vector<2x64xf32>
    %259 = math.tanh %258 : vector<2x64xf32>
    %260 = vector.extract_strided_slice %245 {offsets = [0, 192], sizes = [2, 64], strides = [1, 1]} : vector<2x256xf32> to vector<2x64xf32>
    %261 = arith.negf %260 : vector<2x64xf32>
    %262 = math.exp %261 : vector<2x64xf32>
    %cst_63 = arith.constant 1.000000e+00 : f32
    %263 = vector.broadcast %cst_63 : f32 to vector<2x64xf32>
    %264 = arith.addf %263, %262 : vector<2x64xf32>
    %265 = arith.divf %263, %264 : vector<2x64xf32>
    %266 = arith.mulf %257, %234 : vector<2x64xf32>
    %267 = arith.mulf %251, %259 : vector<2x64xf32>
    %268 = arith.addf %266, %267 : vector<2x64xf32>
    %269 = math.tanh %268 : vector<2x64xf32>
    %270 = arith.mulf %265, %269 : vector<2x64xf32>
    %271 = arith.index_cast %c7_i32 : i32 to index
    %c0_64 = arith.constant 0 : index
    %c0_65 = arith.constant 0 : index
    %272 = vector.load %arg3[%271, %c0_64, %c0_65] : memref<8x2x64xf32, #tpu.memory_space<vmem>>, vector<1x2x64xf32>
    %273 = vector.shape_cast %272 : vector<1x2x64xf32> to vector<2x64xf32>
    %274 = vector.shape_cast %270 : vector<2x64xf32> to vector<1x2x64xf32>
    tpu.vector_store %arg3[%271, %c0_64, %c0_65], %274 {strides = array<i32>} : memref<8x2x64xf32, #tpu.memory_space<vmem>>, vector<1x2x64xf32>,
    %c8_i32 = arith.constant 8 : i32
    %c0_66 = arith.constant 0 : index
    %c0_67 = arith.constant 0 : index
    %275 = vector.load %arg4[%c0_66, %c0_67] : memref<2x64xf32, #tpu.memory_space<vmem>>, vector<2x64xf32>
    tpu.vector_store %arg4[%c0_66, %c0_67], %270 {strides = array<i32>} : memref<2x64xf32, #tpu.memory_space<vmem>>, vector<2x64xf32>,
    %c0_68 = arith.constant 0 : index
    %c0_69 = arith.constant 0 : index
    %276 = vector.load %arg5[%c0_68, %c0_69] : memref<2x64xf32, #tpu.memory_space<vmem>>, vector<2x64xf32>
    tpu.vector_store %arg5[%c0_68, %c0_69], %268 {strides = array<i32>} : memref<2x64xf32, #tpu.memory_space<vmem>>, vector<2x64xf32>,
    return
  }
  func.func @transform_0(%arg0: i32) -> (i32, i32, i32) {
    %c0_i32 = arith.constant 0 : i32
    %c0_i32_0 = arith.constant 0 : i32
    %c0_i32_1 = arith.constant 0 : i32
    %c0_i32_2 = arith.constant 0 : i32
    return %c0_i32, %c0_i32_0, %c0_i32_1 : i32, i32, i32
  }
  func.func @transform_1(%arg0: i32) -> (i32, i32) {
    %c0_i32 = arith.constant 0 : i32
    %c0_i32_0 = arith.constant 0 : i32
    %c0_i32_1 = arith.constant 0 : i32
    return %c0_i32, %c0_i32_0 : i32, i32
  }
  func.func @transform_2(%arg0: i32) -> (i32, i32, i32) {
    %c0_i32 = arith.constant 0 : i32
    %c0_i32_0 = arith.constant 0 : i32
    %c0_i32_1 = arith.constant 0 : i32
    %c0_i32_2 = arith.constant 0 : i32
    return %c0_i32, %c0_i32_0, %c0_i32_1 : i32, i32, i32
  }
  func.func @transform_3(%arg0: i32) -> (i32, i32) {
    %c0_i32 = arith.constant 0 : i32
    %c0_i32_0 = arith.constant 0 : i32
    %c0_i32_1 = arith.constant 0 : i32
    return %c0_i32, %c0_i32_0 : i32, i32
  }
  func.func @transform_4(%arg0: i32) -> (i32, i32) {
    %c0_i32 = arith.constant 0 : i32
    %c0_i32_0 = arith.constant 0 : i32
    %c0_i32_1 = arith.constant 0 : i32
    return %c0_i32, %c0_i32_0 : i32, i32
  }
}

</mosaic_0001>

<llo_original>
// kernel: reverse
$region0: #{reverse}
  #allocation0 [shape = 's32[1]{0}', space=sflag, size = 0x4, scoped, tag = 'scoped memory for reverse']
  %s0 = inlined_call_operand.vmem [shape: bf16[8,2,32], index: 0, kind: input, shape index: {}]
  %s1 = inlined_call_operand.vmem [shape: bf16[8,2,32], index: 1, kind: output, shape index: {}]
  %s2 = scalar_lea.vmem %s0, 7
  %s4 = sor.u32 3, 1
  %s5 = sand.u32 %s4, 1
  %v6 = vld [vmem:[%s2] sm:%s5]
  %v7 = vunpack.c.l.bf16 %v6
  %v8 = vunpack.c.h.bf16 %v6
  %v9 = vpack.c.bf16 0.0, %v7
  %10 = vst [vmem:[%s1] sm:$0x1] %v9
  %s11 = scalar_lea.vmem %s0, 6
  %s13 = sor.u32 3, 1
  %s14 = sand.u32 %s13, 1
  %v15 = vld [vmem:[%s11] sm:%s14]
  %v16 = vunpack.c.l.bf16 %v15
  %v17 = vunpack.c.h.bf16 %v15
  %s18 = scalar_lea.vmem %s1, 1
  %v19 = vpack.c.bf16 0.0, %v16
  %20 = vst [vmem:[%s18] sm:$0x1] %v19
  %s21 = scalar_lea.vmem %s0, 5
  %s23 = sor.u32 3, 1
  %s24 = sand.u32 %s23, 1
  %v25 = vld [vmem:[%s21] sm:%s24]
  %v26 = vunpack.c.l.bf16 %v25
  %v27 = vunpack.c.h.bf16 %v25
  %s28 = scalar_lea.vmem %s1, 2
  %v29 = vpack.c.bf16 0.0, %v26
  %30 = vst [vmem:[%s28] sm:$0x1] %v29
  %s31 = scalar_lea.vmem %s0, 4
  %s33 = sor.u32 3, 1
  %s34 = sand.u32 %s33, 1
  %v35 = vld [vmem:[%s31] sm:%s34]
  %v36 = vunpack.c.l.bf16 %v35
  %v37 = vunpack.c.h.bf16 %v35
  %s38 = scalar_lea.vmem %s1, 3
  %v39 = vpack.c.bf16 0.0, %v36
  %40 = vst [vmem:[%s38] sm:$0x1] %v39
  %s41 = scalar_lea.vmem %s0, 3
  %s43 = sor.u32 3, 1
  %s44 = sand.u32 %s43, 1
  %v45 = vld [vmem:[%s41] sm:%s44]
  %v46 = vunpack.c.l.bf16 %v45
  %v47 = vunpack.c.h.bf16 %v45
  %s48 = scalar_lea.vmem %s1, 4
  %v49 = vpack.c.bf16 0.0, %v46
  %50 = vst [vmem:[%s48] sm:$0x1] %v49
  %s51 = scalar_lea.vmem %s0, 2
  %s53 = sor.u32 3, 1
  %s54 = sand.u32 %s53, 1
  %v55 = vld [vmem:[%s51] sm:%s54]
  %v56 = vunpack.c.l.bf16 %v55
  %v57 = vunpack.c.h.bf16 %v55
  %s58 = scalar_lea.vmem %s1, 5
  %v59 = vpack.c.bf16 0.0, %v56
  %60 = vst [vmem:[%s58] sm:$0x1] %v59
  %s61 = scalar_lea.vmem %s0, 1
  %s63 = sor.u32 3, 1
  %s64 = sand.u32 %s63, 1
  %v65 = vld [vmem:[%s61] sm:%s64]
  %v66 = vunpack.c.l.bf16 %v65
  %v67 = vunpack.c.h.bf16 %v65
  %s68 = scalar_lea.vmem %s1, 6
  %v69 = vpack.c.bf16 0.0, %v66
  %70 = vst [vmem:[%s68] sm:$0x1] %v69
  %s72 = sor.u32 3, 1
  %s73 = sand.u32 %s72, 1
  %v74 = vld [vmem:[%s0] sm:%s73]
  %v75 = vunpack.c.l.bf16 %v74
  %v76 = vunpack.c.h.bf16 %v74
  %s77 = scalar_lea.vmem %s1, 7
  %v78 = vpack.c.bf16 0.0, %v75
  %79 = vst [vmem:[%s77] sm:$0x1] %v78

// kernel: encoder_forward.2
$region0: #{encoder_forward.2}
  #allocation0 [shape = 'u32[]', space=smem, size = 0x4, offset = 0x4, fixed_abs, tag = 'smem constant byte address 0x4 - core index']
  #allocation1 [shape = 'u32[144,128]{1,0:T(1,128)}', space=vmem, size = 0x12000, scoped, tag = 'internal scratch']
  %s0 = inlined_call_operand.vmem [shape: f32[8,2,256], index: 0, kind: input, shape index: {}]
  %s1 = inlined_call_operand.vmem [shape: f32[64,256], index: 1, kind: input, shape index: {}]
  %s2 = inlined_call_operand.vmem [shape: f32[8,2,64], index: 2, kind: output, shape index: {0}]
  %s3 = inlined_call_operand.vmem [shape: f32[2,64], index: 3, kind: output, shape index: {1}]
  %s4 = inlined_call_operand.vmem [shape: f32[2,64], index: 4, kind: output, shape index: {2}]
  %5 = xla_tuple %s2, %s3, %s4
  %s6 = sld [smem:[#allocation0]]
  $region34: #{encoder_forward.2} parent=0
    _
  %s8 = ssub.s32 1, %s6
  %s9 = scalar_select 0, %s8, %s6
  // Predicated region
  $region2: #{encoder_forward.2} parent=0 // pred_check
    _
  $region3: #{encoder_forward.2} parent=0 // pred_check_branch
    %11 = sbr.rel (0) target = $region5
  $region4: #{encoder_forward.2} parent=0 // pred_region
    _
  $region5: #{encoder_forward.2} parent=0 // pred_fallthru
    _
  // Predicated region
  $region6: #{encoder_forward.2} parent=0 // pred_check
    _
  $region7: #{encoder_forward.2} parent=0 // pred_check_branch
    %13 = sbr.rel (0) target = $region9
  $region8: #{encoder_forward.2} parent=0 // pred_region
    _
  $region9: #{encoder_forward.2} parent=0 // pred_fallthru
    _
  %v14 = vld [vmem:[%s1] sm:$0xff]
  %v15 = vld [vmem:[%s1 + $0x8] sm:$0xff]
  %v16 = vld [vmem:[%s1 + $0x10] sm:$0xff]
  %v17 = vld [vmem:[%s1 + $0x18] sm:$0xff]
  %v18 = vld [vmem:[%s1 + $0x20] sm:$0xff]
  %v19 = vld [vmem:[%s1 + $0x28] sm:$0xff]
  %v20 = vld [vmem:[%s1 + $0x30] sm:$0xff]
  %v21 = vld [vmem:[%s1 + $0x38] sm:$0xff]
  %v22 = vld [vmem:[%s1 + $0x40] sm:$0xff]
  %v23 = vld [vmem:[%s1 + $0x48] sm:$0xff]
  %v24 = vld [vmem:[%s1 + $0x50] sm:$0xff]
  %v25 = vld [vmem:[%s1 + $0x58] sm:$0xff]
  %v26 = vld [vmem:[%s1 + $0x60] sm:$0xff]
  %v27 = vld [vmem:[%s1 + $0x68] sm:$0xff]
  %v28 = vld [vmem:[%s1 + $0x70] sm:$0xff]
  %v29 = vld [vmem:[%s1 + $0x78] sm:$0xff]
  %v30 = vld [vmem:[%s0] sm:$0xf]
  %vm31 = vcmask 523264
  %v33 = vsel %vm31, 0.0, 0
  %35 = vmatprep.subr.mxu0 %v15
  %36 = vmatpush1.msra.mxu0 %v14
  %37 = vmatprep.subr.mxu0 %v17
  %38 = vmatpush1.msra.mxu0 %v16
  %39 = vmatprep.subr.mxu0 %v19
  %40 = vmatpush1.msra.mxu0 %v18
  %41 = vmatprep.subr.mxu0 %v21
  %42 = vmatpush1.msra.mxu0 %v20
  %43 = vmatprep.subr.mxu0 %v23
  %44 = vmatpush1.msra.mxu0 %v22
  %45 = vmatprep.subr.mxu0 %v25
  %46 = vmatpush1.msra.mxu0 %v24
  %47 = vmatprep.subr.mxu0 %v27
  %48 = vmatpush1.msra.mxu0 %v26
  %49 = vmatprep.subr.mxu0 %v29
  %50 = vmatpush1.msra.mxu0 %v28
  %51 = vmatprep.subr.mxu0 0.0
  %52 = vmatpush1.msra.mxu0 0.0
  %53 = vmatprep.subr.mxu0 0.0
  %54 = vmatpush1.msra.mxu0 0.0
  %55 = vmatprep.subr.mxu0 0.0
  %56 = vmatpush1.msra.mxu0 0.0
  %57 = vmatprep.subr.mxu0 0.0
  %58 = vmatpush1.msra.mxu0 0.0
  %59 = vmatprep.subr.mxu0 0.0
  %60 = vmatpush1.msra.mxu0 0.0
  %61 = vmatprep.subr.mxu0 0.0
  %62 = vmatpush1.msra.mxu0 0.0
  %63 = vmatprep.subr.mxu0 0.0
  %64 = vmatpush1.msra.mxu0 0.0
  %65 = vmatprep.subr.mxu0 0.0
  %66 = vmatpush1.msra.mxu0 0.0
  %67 = vmatprep.subr.mxu0 0.0
  %68 = vmatpush1.msra.mxu0 0.0
  %69 = vmatprep.subr.mxu0 0.0
  %70 = vmatpush1.msra.mxu0 0.0
  %71 = vmatprep.subr.mxu0 0.0
  %72 = vmatpush1.msra.mxu0 0.0
  %73 = vmatprep.subr.mxu0 0.0
  %74 = vmatpush1.msra.mxu0 0.0
  %75 = vmatprep.subr.mxu0 0.0
  %76 = vmatpush1.msra.mxu0 0.0
  %77 = vmatprep.subr.mxu0 0.0
  %78 = vmatpush1.msra.mxu0 0.0
  %79 = vmatprep.subr.mxu0 0.0
  %80 = vmatpush1.msra.mxu0 0.0
  %81 = vmatprep.subr.mxu0 0.0
  %82 = vmatpush1.msra.mxu0 0.0
  %83 = vmatprep.subr.mxu0 0.0
  %84 = vmatpush1.msra.mxu0 0.0
  %85 = vmatprep.subr.mxu0 0.0
  %86 = vmatpush1.msra.mxu0 0.0
  %87 = vmatprep.subr.mxu0 0.0
  %88 = vmatpush1.msra.mxu0 0.0
  %89 = vmatprep.subr.mxu0 0.0
  %90 = vmatpush1.msra.mxu0 0.0
  %91 = vmatprep.subr.mxu0 0.0
  %92 = vmatpush1.msra.mxu0 0.0
  %93 = vmatprep.subr.mxu0 0.0
  %94 = vmatpush1.msra.mxu0 0.0
  %95 = vmatprep.subr.mxu0 0.0
  %96 = vmatpush1.msra.mxu0 0.0
  %97 = vmatprep.subr.mxu0 0.0
  %98 = vmatpush1.msra.mxu0 0.0
  %99 = vmatprep.mubr.f32.mxu0 0.0
  %100 = vmatmul.mubr.f32.gmra.mrb[0].mxu0 %v33
  %v101 = vpop.f32.mrb[0].mxu0
  %v102 = vadd.f32 0.0, %v101
  %v103 = vpop.f32.mrb[0].mxu0
  %v104 = vadd.f32 0.0, %v103
  %105 = vdwg.mxu0
  %v108 = vcombine.low %v102, %v104
  %v110 = vunpack.c.l.s4 1983009808
  %v111 = vunpack.c.0.s8 %v110
  %v112 = vlaneseq
  %v113 = vshrl.u32 %v112, 7
  %v114 = vsub.s32 %v111, %v113
  %v115 = vrot.slane %v108, %v114
  %v117 = vadd.f32 %v30, %v115
  %v118 = vxor.u32 %v117, 2147483648
  %v119 = vmul.f32 %v118, 1.442695
  %v120 = vpow.pop %v119
  %v121 = vadd.f32 %v120, 1.0
  %v122 = vrcp.pop %v121
  %v123 = vmul.f32 1.0, %v122
  %v125 = vrot.slane %v117, 2
  %v127 = vtanh.pop %v125
  %128 = vrot.lane.b32.xlu0 %v117, 64
  %v129 = vpop.permute.xlu0 %128
  %v130 = vrot.slane %v129, 2
  %v132 = vxor.u32 %v130, 2147483648
  %v133 = vmul.f32 %v132, 1.442695
  %v134 = vpow.pop %v133
  %v135 = vadd.f32 %v134, 1.0
  %v136 = vrcp.pop %v135
  %v137 = vmul.f32 1.0, %v136
  %v138 = vmul.f32 %v123, 0.0
  %v139 = vmul.f32 %v123, %v127
  %141 = vrot.lane.b32.xlu0 %v139, 64
  %v142 = vpop.permute.xlu0 %141
  %v144 = vadd.f32 %v138, %v142
  %v145 = vtanh.pop %v144
  %147 = vrot.lane.b32.xlu0 %v145, 64
  %v148 = vpop.permute.xlu0 %147
  %v150 = vmul.f32 %v137, %v148
  %vm151 = vcmask 517120
  %152 = vst.msk [vmem:[%s2] sm:$0x3] %vm151, %v150
  %s153 = scalar_lea.vmem %s0, 4
  %v154 = vld [vmem:[%s153] sm:$0xf]
  %v156 = vsel %vm31, %v150, 0
  %158 = vmatprep.subr.mxu0 %v15
  %159 = vmatpush1.msra.mxu0 %v14
  %160 = vmatprep.subr.mxu0 %v17
  %161 = vmatpush1.msra.mxu0 %v16
  %162 = vmatprep.subr.mxu0 %v19
  %163 = vmatpush1.msra.mxu0 %v18
  %164 = vmatprep.subr.mxu0 %v21
  %165 = vmatpush1.msra.mxu0 %v20
  %166 = vmatprep.subr.mxu0 %v23
  %167 = vmatpush1.msra.mxu0 %v22
  %168 = vmatprep.subr.mxu0 %v25
  %169 = vmatpush1.msra.mxu0 %v24
  %170 = vmatprep.subr.mxu0 %v27
  %171 = vmatpush1.msra.mxu0 %v26
  %172 = vmatprep.subr.mxu0 %v29
  %173 = vmatpush1.msra.mxu0 %v28
  %174 = vmatprep.subr.mxu0 0.0
  %175 = vmatpush1.msra.mxu0 0.0
  %176 = vmatprep.subr.mxu0 0.0
  %177 = vmatpush1.msra.mxu0 0.0
  %178 = vmatprep.subr.mxu0 0.0
  %179 = vmatpush1.msra.mxu0 0.0
  %180 = vmatprep.subr.mxu0 0.0
  %181 = vmatpush1.msra.mxu0 0.0
  %182 = vmatprep.subr.mxu0 0.0
  %183 = vmatpush1.msra.mxu0 0.0
  %184 = vmatprep.subr.mxu0 0.0
  %185 = vmatpush1.msra.mxu0 0.0
  %186 = vmatprep.subr.mxu0 0.0
  %187 = vmatpush1.msra.mxu0 0.0
  %188 = vmatprep.subr.mxu0 0.0
  %189 = vmatpush1.msra.mxu0 0.0
  %190 = vmatprep.subr.mxu0 0.0
  %191 = vmatpush1.msra.mxu0 0.0
  %192 = vmatprep.subr.mxu0 0.0
  %193 = vmatpush1.msra.mxu0 0.0
  %194 = vmatprep.subr.mxu0 0.0
  %195 = vmatpush1.msra.mxu0 0.0
  %196 = vmatprep.subr.mxu0 0.0
  %197 = vmatpush1.msra.mxu0 0.0
  %198 = vmatprep.subr.mxu0 0.0
  %199 = vmatpush1.msra.mxu0 0.0
  %200 = vmatprep.subr.mxu0 0.0
  %201 = vmatpush1.msra.mxu0 0.0
  %202 = vmatprep.subr.mxu0 0.0
  %203 = vmatpush1.msra.mxu0 0.0
  %204 = vmatprep.subr.mxu0 0.0
  %205 = vmatpush1.msra.mxu0 0.0
  %206 = vmatprep.subr.mxu0 0.0
  %207 = vmatpush1.msra.mxu0 0.0
  %208 = vmatprep.subr.mxu0 0.0
  %209 = vmatpush1.msra.mxu0 0.0
  %210 = vmatprep.subr.mxu0 0.0
  %211 = vmatpush1.msra.mxu0 0.0
  %212 = vmatprep.subr.mxu0 0.0
  %213 = vmatpush1.msra.mxu0 0.0
  %214 = vmatprep.subr.mxu0 0.0
  %215 = vmatpush1.msra.mxu0 0.0
  %216 = vmatprep.subr.mxu0 0.0
  %217 = vmatpush1.msra.mxu0 0.0
  %218 = vmatprep.subr.mxu0 0.0
  %219 = vmatpush1.msra.mxu0 0.0
  %220 = vmatprep.subr.mxu0 0.0
  %221 = vmatpush1.msra.mxu0 0.0
  %222 = vmatprep.mubr.f32.mxu0 0.0
  %223 = vmatmul.mubr.f32.gmra.mrb[0].mxu0 %v156
  %v224 = vpop.f32.mrb[0].mxu0
  %v225 = vadd.f32 0.0, %v224
  %v226 = vpop.f32.mrb[0].mxu0
  %v227 = vadd.f32 0.0, %v226
  %228 = vdwg.mxu0
  %v231 = vcombine.low %v225, %v227
  %v233 = vunpack.c.l.s4 1983009808
  %v234 = vunpack.c.0.s8 %v233
  %v235 = vlaneseq
  %v236 = vshrl.u32 %v235, 7
  %v237 = vsub.s32 %v234, %v236
  %v238 = vrot.slane %v231, %v237
  %v240 = vadd.f32 %v154, %v238
  %v241 = vxor.u32 %v240, 2147483648
  %v242 = vmul.f32 %v241, 1.442695
  %v243 = vpow.pop %v242
  %v244 = vadd.f32 %v243, 1.0
  %v245 = vrcp.pop %v244
  %v246 = vmul.f32 1.0, %v245
  %v248 = vrot.slane %v240, 2
  %v250 = vtanh.pop %v248
  %251 = vrot.lane.b32.xlu0 %v240, 64
  %v252 = vpop.permute.xlu0 %251
  %v253 = vrot.slane %v252, 2
  %v255 = vxor.u32 %v253, 2147483648
  %v256 = vmul.f32 %v255, 1.442695
  %v257 = vpow.pop %v256
  %v258 = vadd.f32 %v257, 1.0
  %v259 = vrcp.pop %v258
  %v260 = vmul.f32 1.0, %v259
  %v261 = vmul.f32 %v246, %v144
  %v262 = vmul.f32 %v246, %v250
  %264 = vrot.lane.b32.xlu0 %v262, 64
  %v265 = vpop.permute.xlu0 %264
  %v267 = vadd.f32 %v261, %v265
  %v268 = vtanh.pop %v267
  %270 = vrot.lane.b32.xlu0 %v268, 64
  %v271 = vpop.permute.xlu0 %270
  %v273 = vmul.f32 %v260, %v271
  %s274 = scalar_lea.vmem %s2, 2
  %275 = vst.msk [vmem:[%s274] sm:$0x3] %vm151, %v273
  %s276 = scalar_lea.vmem %s0, 8
  %v277 = vld [vmem:[%s276] sm:$0xf]
  %v279 = vsel %vm31, %v273, 0
  %281 = vmatprep.subr.mxu0 %v15
  %282 = vmatpush1.msra.mxu0 %v14
  %283 = vmatprep.subr.mxu0 %v17
  %284 = vmatpush1.msra.mxu0 %v16
  %285 = vmatprep.subr.mxu0 %v19
  %286 = vmatpush1.msra.mxu0 %v18
  %287 = vmatprep.subr.mxu0 %v21
  %288 = vmatpush1.msra.mxu0 %v20
  %289 = vmatprep.subr.mxu0 %v23
  %290 = vmatpush1.msra.mxu0 %v22
  %291 = vmatprep.subr.mxu0 %v25
  %292 = vmatpush1.msra.mxu0 %v24
  %293 = vmatprep.subr.mxu0 %v27
  %294 = vmatpush1.msra.mxu0 %v26
  %295 = vmatprep.subr.mxu0 %v29
  %296 = vmatpush1.msra.mxu0 %v28
  %297 = vmatprep.subr.mxu0 0.0
  %298 = vmatpush1.msra.mxu0 0.0
  %299 = vmatprep.subr.mxu0 0.0
  %300 = vmatpush1.msra.mxu0 0.0
  %301 = vmatprep.subr.mxu0 0.0
  %302 = vmatpush1.msra.mxu0 0.0
  %303 = vmatprep.subr.mxu0 0.0
  %304 = vmatpush1.msra.mxu0 0.0
  %305 = vmatprep.subr.mxu0 0.0
  %306 = vmatpush1.msra.mxu0 0.0
  %307 = vmatprep.subr.mxu0 0.0
  %308 = vmatpush1.msra.mxu0 0.0
  %309 = vmatprep.subr.mxu0 0.0
  %310 = vmatpush1.msra.mxu0 0.0
  %311 = vmatprep.subr.mxu0 0.0
  %312 = vmatpush1.msra.mxu0 0.0
  %313 = vmatprep.subr.mxu0 0.0
  %314 = vmatpush1.msra.mxu0 0.0
  %315 = vmatprep.subr.mxu0 0.0
  %316 = vmatpush1.msra.mxu0 0.0
  %317 = vmatprep.subr.mxu0 0.0
  %318 = vmatpush1.msra.mxu0 0.0
  %319 = vmatprep.subr.mxu0 0.0
  %320 = vmatpush1.msra.mxu0 0.0
  %321 = vmatprep.subr.mxu0 0.0
  %322 = vmatpush1.msra.mxu0 0.0
  %323 = vmatprep.subr.mxu0 0.0
  %324 = vmatpush1.msra.mxu0 0.0
  %325 = vmatprep.subr.mxu0 0.0
  %326 = vmatpush1.msra.mxu0 0.0
  %327 = vmatprep.subr.mxu0 0.0
  %328 = vmatpush1.msra.mxu0 0.0
  %329 = vmatprep.subr.mxu0 0.0
  %330 = vmatpush1.msra.mxu0 0.0
  %331 = vmatprep.subr.mxu0 0.0
  %332 = vmatpush1.msra.mxu0 0.0
  %333 = vmatprep.subr.mxu0 0.0
  %334 = vmatpush1.msra.mxu0 0.0
  %335 = vmatprep.subr.mxu0 0.0
  %336 = vmatpush1.msra.mxu0 0.0
  %337 = vmatprep.subr.mxu0 0.0
  %338 = vmatpush1.msra.mxu0 0.0
  %339 = vmatprep.subr.mxu0 0.0
  %340 = vmatpush1.msra.mxu0 0.0
  %341 = vmatprep.subr.mxu0 0.0
  %342 = vmatpush1.msra.mxu0 0.0
  %343 = vmatprep.subr.mxu0 0.0
  %344 = vmatpush1.msra.mxu0 0.0
  %345 = vmatprep.mubr.f32.mxu0 0.0
  %346 = vmatmul.mubr.f32.gmra.mrb[0].mxu0 %v279
  %v347 = vpop.f32.mrb[0].mxu0
  %v348 = vadd.f32 0.0, %v347
  %v349 = vpop.f32.mrb[0].mxu0
  %v350 = vadd.f32 0.0, %v349
  %351 = vdwg.mxu0
  %v354 = vcombine.low %v348, %v350
  %v356 = vunpack.c.l.s4 1983009808
  %v357 = vunpack.c.0.s8 %v356
  %v358 = vlaneseq
  %v359 = vshrl.u32 %v358, 7
  %v360 = vsub.s32 %v357, %v359
  %v361 = vrot.slane %v354, %v360
  %v363 = vadd.f32 %v277, %v361
  %v364 = vxor.u32 %v363, 2147483648
  %v365 = vmul.f32 %v364, 1.442695
  %v366 = vpow.pop %v365
  %v367 = vadd.f32 %v366, 1.0
  %v368 = vrcp.pop %v367
  %v369 = vmul.f32 1.0, %v368
  %v371 = vrot.slane %v363, 2
  %v373 = vtanh.pop %v371
  %374 = vrot.lane.b32.xlu0 %v363, 64
  %v375 = vpop.permute.xlu0 %374
  %v376 = vrot.slane %v375, 2
  %v378 = vxor.u32 %v376, 2147483648
  %v379 = vmul.f32 %v378, 1.442695
  %v380 = vpow.pop %v379
  %v381 = vadd.f32 %v380, 1.0
  %v382 = vrcp.pop %v381
  %v383 = vmul.f32 1.0, %v382
  %v384 = vmul.f32 %v369, %v267
  %v385 = vmul.f32 %v369, %v373
  %387 = vrot.lane.b32.xlu0 %v385, 64
  %v388 = vpop.permute.xlu0 %387
  %v390 = vadd.f32 %v384, %v388
  %v391 = vtanh.pop %v390
  %393 = vrot.lane.b32.xlu0 %v391, 64
  %v394 = vpop.permute.xlu0 %393
  %v396 = vmul.f32 %v383, %v394
  %s397 = scalar_lea.vmem %s2, 4
  %398 = vst.msk [vmem:[%s397] sm:$0x3] %vm151, %v396
  %s399 = scalar_lea.vmem %s0, 12
  %v400 = vld [vmem:[%s399] sm:$0xf]
  %v402 = vsel %vm31, %v396, 0
  %404 = vmatprep.subr.mxu0 %v15
  %405 = vmatpush1.msra.mxu0 %v14
  %406 = vmatprep.subr.mxu0 %v17
  %407 = vmatpush1.msra.mxu0 %v16
  %408 = vmatprep.subr.mxu0 %v19
  %409 = vmatpush1.msra.mxu0 %v18
  %410 = vmatprep.subr.mxu0 %v21
  %411 = vmatpush1.msra.mxu0 %v20
  %412 = vmatprep.subr.mxu0 %v23
  %413 = vmatpush1.msra.mxu0 %v22
  %414 = vmatprep.subr.mxu0 %v25
  %415 = vmatpush1.msra.mxu0 %v24
  %416 = vmatprep.subr.mxu0 %v27
  %417 = vmatpush1.msra.mxu0 %v26
  %418 = vmatprep.subr.mxu0 %v29
  %419 = vmatpush1.msra.mxu0 %v28
  %420 = vmatprep.subr.mxu0 0.0
  %421 = vmatpush1.msra.mxu0 0.0
  %422 = vmatprep.subr.mxu0 0.0
  %423 = vmatpush1.msra.mxu0 0.0
  %424 = vmatprep.subr.mxu0 0.0
  %425 = vmatpush1.msra.mxu0 0.0
  %426 = vmatprep.subr.mxu0 0.0
  %427 = vmatpush1.msra.mxu0 0.0
  %428 = vmatprep.subr.mxu0 0.0
  %429 = vmatpush1.msra.mxu0 0.0
  %430 = vmatprep.subr.mxu0 0.0
  %431 = vmatpush1.msra.mxu0 0.0
  %432 = vmatprep.subr.mxu0 0.0
  %433 = vmatpush1.msra.mxu0 0.0
  %434 = vmatprep.subr.mxu0 0.0
  %435 = vmatpush1.msra.mxu0 0.0
  %436 = vmatprep.subr.mxu0 0.0
  %437 = vmatpush1.msra.mxu0 0.0
  %438 = vmatprep.subr.mxu0 0.0
  %439 = vmatpush1.msra.mxu0 0.0
  %440 = vmatprep.subr.mxu0 0.0
  %441 = vmatpush1.msra.mxu0 0.0
  %442 = vmatprep.subr.mxu0 0.0
  %443 = vmatpush1.msra.mxu0 0.0
  %444 = vmatprep.subr.mxu0 0.0
  %445 = vmatpush1.msra.mxu0 0.0
  %446 = vmatprep.subr.mxu0 0.0
  %447 = vmatpush1.msra.mxu0 0.0
  %448 = vmatprep.subr.mxu0 0.0
  %449 = vmatpush1.msra.mxu0 0.0
  %450 = vmatprep.subr.mxu0 0.0
  %451 = vmatpush1.msra.mxu0 0.0
  %452 = vmatprep.subr.mxu0 0.0
  %453 = vmatpush1.msra.mxu0 0.0
  %454 = vmatprep.subr.mxu0 0.0
  %455 = vmatpush1.msra.mxu0 0.0
  %456 = vmatprep.subr.mxu0 0.0
  %457 = vmatpush1.msra.mxu0 0.0
  %458 = vmatprep.subr.mxu0 0.0
  %459 = vmatpush1.msra.mxu0 0.0
  %460 = vmatprep.subr.mxu0 0.0
  %461 = vmatpush1.msra.mxu0 0.0
  %462 = vmatprep.subr.mxu0 0.0
  %463 = vmatpush1.msra.mxu0 0.0
  %464 = vmatprep.subr.mxu0 0.0
  %465 = vmatpush1.msra.mxu0 0.0
  %466 = vmatprep.subr.mxu0 0.0
  %467 = vmatpush1.msra.mxu0 0.0
  %468 = vmatprep.mubr.f32.mxu0 0.0
  %469 = vmatmul.mubr.f32.gmra.mrb[0].mxu0 %v402
  %v470 = vpop.f32.mrb[0].mxu0
  %v471 = vadd.f32 0.0, %v470
  %v472 = vpop.f32.mrb[0].mxu0
  %v473 = vadd.f32 0.0, %v472
  %474 = vdwg.mxu0
  %v477 = vcombine.low %v471, %v473
  %v479 = vunpack.c.l.s4 1983009808
  %v480 = vunpack.c.0.s8 %v479
  %v481 = vlaneseq
  %v482 = vshrl.u32 %v481, 7
  %v483 = vsub.s32 %v480, %v482
  %v484 = vrot.slane %v477, %v483
  %v486 = vadd.f32 %v400, %v484
  %v487 = vxor.u32 %v486, 2147483648
  %v488 = vmul.f32 %v487, 1.442695
  %v489 = vpow.pop %v488
  %v490 = vadd.f32 %v489, 1.0
  %v491 = vrcp.pop %v490
  %v492 = vmul.f32 1.0, %v491
  %v494 = vrot.slane %v486, 2
  %v496 = vtanh.pop %v494
  %497 = vrot.lane.b32.xlu0 %v486, 64
  %v498 = vpop.permute.xlu0 %497
  %v499 = vrot.slane %v498, 2
  %v501 = vxor.u32 %v499, 2147483648
  %v502 = vmul.f32 %v501, 1.442695
  %v503 = vpow.pop %v502
  %v504 = vadd.f32 %v503, 1.0
  %v505 = vrcp.pop %v504
  %v506 = vmul.f32 1.0, %v505
  %v507 = vmul.f32 %v492, %v390
  %v508 = vmul.f32 %v492, %v496
  %510 = vrot.lane.b32.xlu0 %v508, 64
  %v511 = vpop.permute.xlu0 %510
  %v513 = vadd.f32 %v507, %v511
  %v514 = vtanh.pop %v513
  %516 = vrot.lane.b32.xlu0 %v514, 64
  %v517 = vpop.permute.xlu0 %516
  %v519 = vmul.f32 %v506, %v517
  %s520 = scalar_lea.vmem %s2, 6
  %521 = vst.msk [vmem:[%s520] sm:$0x3] %vm151, %v519
  %s522 = scalar_lea.vmem %s0, 16
  %v523 = vld [vmem:[%s522] sm:$0xf]
  %v525 = vsel %vm31, %v519, 0
  %527 = vmatprep.subr.mxu0 %v15
  %528 = vmatpush1.msra.mxu0 %v14
  %529 = vmatprep.subr.mxu0 %v17
  %530 = vmatpush1.msra.mxu0 %v16
  %531 = vmatprep.subr.mxu0 %v19
  %532 = vmatpush1.msra.mxu0 %v18
  %533 = vmatprep.subr.mxu0 %v21
  %534 = vmatpush1.msra.mxu0 %v20
  %535 = vmatprep.subr.mxu0 %v23
  %536 = vmatpush1.msra.mxu0 %v22
  %537 = vmatprep.subr.mxu0 %v25
  %538 = vmatpush1.msra.mxu0 %v24
  %539 = vmatprep.subr.mxu0 %v27
  %540 = vmatpush1.msra.mxu0 %v26
  %541 = vmatprep.subr.mxu0 %v29
  %542 = vmatpush1.msra.mxu0 %v28
  %543 = vmatprep.subr.mxu0 0.0
  %544 = vmatpush1.msra.mxu0 0.0
  %545 = vmatprep.subr.mxu0 0.0
  %546 = vmatpush1.msra.mxu0 0.0
  %547 = vmatprep.subr.mxu0 0.0
  %548 = vmatpush1.msra.mxu0 0.0
  %549 = vmatprep.subr.mxu0 0.0
  %550 = vmatpush1.msra.mxu0 0.0
  %551 = vmatprep.subr.mxu0 0.0
  %552 = vmatpush1.msra.mxu0 0.0
  %553 = vmatprep.subr.mxu0 0.0
  %554 = vmatpush1.msra.mxu0 0.0
  %555 = vmatprep.subr.mxu0 0.0
  %556 = vmatpush1.msra.mxu0 0.0
  %557 = vmatprep.subr.mxu0 0.0
  %558 = vmatpush1.msra.mxu0 0.0
  %559 = vmatprep.subr.mxu0 0.0
  %560 = vmatpush1.msra.mxu0 0.0
  %561 = vmatprep.subr.mxu0 0.0
  %562 = vmatpush1.msra.mxu0 0.0
  %563 = vmatprep.subr.mxu0 0.0
  %564 = vmatpush1.msra.mxu0 0.0
  %565 = vmatprep.subr.mxu0 0.0
  %566 = vmatpush1.msra.mxu0 0.0
  %567 = vmatprep.subr.mxu0 0.0
  %568 = vmatpush1.msra.mxu0 0.0
  %569 = vmatprep.subr.mxu0 0.0
  %570 = vmatpush1.msra.mxu0 0.0
  %571 = vmatprep.subr.mxu0 0.0
  %572 = vmatpush1.msra.mxu0 0.0
  %573 = vmatprep.subr.mxu0 0.0
  %574 = vmatpush1.msra.mxu0 0.0
  %575 = vmatprep.subr.mxu0 0.0
  %576 = vmatpush1.msra.mxu0 0.0
  %577 = vmatprep.subr.mxu0 0.0
  %578 = vmatpush1.msra.mxu0 0.0
  %579 = vmatprep.subr.mxu0 0.0
  %580 = vmatpush1.msra.mxu0 0.0
  %581 = vmatprep.subr.mxu0 0.0
  %582 = vmatpush1.msra.mxu0 0.0
  %583 = vmatprep.subr.mxu0 0.0
  %584 = vmatpush1.msra.mxu0 0.0
  %585 = vmatprep.subr.mxu0 0.0
  %586 = vmatpush1.msra.mxu0 0.0
  %587 = vmatprep.subr.mxu0 0.0
  %588 = vmatpush1.msra.mxu0 0.0
  %589 = vmatprep.subr.mxu0 0.0
  %590 = vmatpush1.msra.mxu0 0.0
  %591 = vmatprep.mubr.f32.mxu0 0.0
  %592 = vmatmul.mubr.f32.gmra.mrb[0].mxu0 %v525
  %v593 = vpop.f32.mrb[0].mxu0
  %v594 = vadd.f32 0.0, %v593
  %v595 = vpop.f32.mrb[0].mxu0
  %v596 = vadd.f32 0.0, %v595
  %597 = vdwg.mxu0
  %v600 = vcombine.low %v594, %v596
  %v602 = vunpack.c.l.s4 1983009808
  %v603 = vunpack.c.0.s8 %v602
  %v604 = vlaneseq
  %v605 = vshrl.u32 %v604, 7
  %v606 = vsub.s32 %v603, %v605
  %v607 = vrot.slane %v600, %v606
  %v609 = vadd.f32 %v523, %v607
  %v610 = vxor.u32 %v609, 2147483648
  %v611 = vmul.f32 %v610, 1.442695
  %v612 = vpow.pop %v611
  %v613 = vadd.f32 %v612, 1.0
  %v614 = vrcp.pop %v613
  %v615 = vmul.f32 1.0, %v614
  %v617 = vrot.slane %v609, 2
  %v619 = vtanh.pop %v617
  %620 = vrot.lane.b32.xlu0 %v609, 64
  %v621 = vpop.permute.xlu0 %620
  %v622 = vrot.slane %v621, 2
  %v624 = vxor.u32 %v622, 2147483648
  %v625 = vmul.f32 %v624, 1.442695
  %v626 = vpow.pop %v625
  %v627 = vadd.f32 %v626, 1.0
  %v628 = vrcp.pop %v627
  %v629 = vmul.f32 1.0, %v628
  %v630 = vmul.f32 %v615, %v513
  %v631 = vmul.f32 %v615, %v619
  %633 = vrot.lane.b32.xlu0 %v631, 64
  %v634 = vpop.permute.xlu0 %633
  %v636 = vadd.f32 %v630, %v634
  %v637 = vtanh.pop %v636
  %639 = vrot.lane.b32.xlu0 %v637, 64
  %v640 = vpop.permute.xlu0 %639
  %v642 = vmul.f32 %v629, %v640
  %s643 = scalar_lea.vmem %s2, 8
  %644 = vst.msk [vmem:[%s643] sm:$0x3] %vm151, %v642
  %s645 = scalar_lea.vmem %s0, 20
  %v646 = vld [vmem:[%s645] sm:$0xf]
  %v648 = vsel %vm31, %v642, 0
  %650 = vmatprep.subr.mxu0 %v15
  %651 = vmatpush1.msra.mxu0 %v14
  %652 = vmatprep.subr.mxu0 %v17
  %653 = vmatpush1.msra.mxu0 %v16
  %654 = vmatprep.subr.mxu0 %v19
  %655 = vmatpush1.msra.mxu0 %v18
  %656 = vmatprep.subr.mxu0 %v21
  %657 = vmatpush1.msra.mxu0 %v20
  %658 = vmatprep.subr.mxu0 %v23
  %659 = vmatpush1.msra.mxu0 %v22
  %660 = vmatprep.subr.mxu0 %v25
  %661 = vmatpush1.msra.mxu0 %v24
  %662 = vmatprep.subr.mxu0 %v27
  %663 = vmatpush1.msra.mxu0 %v26
  %664 = vmatprep.subr.mxu0 %v29
  %665 = vmatpush1.msra.mxu0 %v28
  %666 = vmatprep.subr.mxu0 0.0
  %667 = vmatpush1.msra.mxu0 0.0
  %668 = vmatprep.subr.mxu0 0.0
  %669 = vmatpush1.msra.mxu0 0.0
  %670 = vmatprep.subr.mxu0 0.0
  %671 = vmatpush1.msra.mxu0 0.0
  %672 = vmatprep.subr.mxu0 0.0
  %673 = vmatpush1.msra.mxu0 0.0
  %674 = vmatprep.subr.mxu0 0.0
  %675 = vmatpush1.msra.mxu0 0.0
  %676 = vmatprep.subr.mxu0 0.0
  %677 = vmatpush1.msra.mxu0 0.0
  %678 = vmatprep.subr.mxu0 0.0
  %679 = vmatpush1.msra.mxu0 0.0
  %680 = vmatprep.subr.mxu0 0.0
  %681 = vmatpush1.msra.mxu0 0.0
  %682 = vmatprep.subr.mxu0 0.0
  %683 = vmatpush1.msra.mxu0 0.0
  %684 = vmatprep.subr.mxu0 0.0
  %685 = vmatpush1.msra.mxu0 0.0
  %686 = vmatprep.subr.mxu0 0.0
  %687 = vmatpush1.msra.mxu0 0.0
  %688 = vmatprep.subr.mxu0 0.0
  %689 = vmatpush1.msra.mxu0 0.0
  %690 = vmatprep.subr.mxu0 0.0
  %691 = vmatpush1.msra.mxu0 0.0
  %692 = vmatprep.subr.mxu0 0.0
  %693 = vmatpush1.msra.mxu0 0.0
  %694 = vmatprep.subr.mxu0 0.0
  %695 = vmatpush1.msra.mxu0 0.0
  %696 = vmatprep.subr.mxu0 0.0
  %697 = vmatpush1.msra.mxu0 0.0
  %698 = vmatprep.subr.mxu0 0.0
  %699 = vmatpush1.msra.mxu0 0.0
  %700 = vmatprep.subr.mxu0 0.0
  %701 = vmatpush1.msra.mxu0 0.0
  %702 = vmatprep.subr.mxu0 0.0
  %703 = vmatpush1.msra.mxu0 0.0
  %704 = vmatprep.subr.mxu0 0.0
  %705 = vmatpush1.msra.mxu0 0.0
  %706 = vmatprep.subr.mxu0 0.0
  %707 = vmatpush1.msra.mxu0 0.0
  %708 = vmatprep.subr.mxu0 0.0
  %709 = vmatpush1.msra.mxu0 0.0
  %710 = vmatprep.subr.mxu0 0.0
  %711 = vmatpush1.msra.mxu0 0.0
  %712 = vmatprep.subr.mxu0 0.0
  %713 = vmatpush1.msra.mxu0 0.0
  %714 = vmatprep.mubr.f32.mxu0 0.0
  %715 = vmatmul.mubr.f32.gmra.mrb[0].mxu0 %v648
  %v716 = vpop.f32.mrb[0].mxu0
  %v717 = vadd.f32 0.0, %v716
  %v718 = vpop.f32.mrb[0].mxu0
  %v719 = vadd.f32 0.0, %v718
  %720 = vdwg.mxu0
  %v723 = vcombine.low %v717, %v719
  %v725 = vunpack.c.l.s4 1983009808
  %v726 = vunpack.c.0.s8 %v725
  %v727 = vlaneseq
  %v728 = vshrl.u32 %v727, 7
  %v729 = vsub.s32 %v726, %v728
  %v730 = vrot.slane %v723, %v729
  %v732 = vadd.f32 %v646, %v730
  %v733 = vxor.u32 %v732, 2147483648
  %v734 = vmul.f32 %v733, 1.442695
  %v735 = vpow.pop %v734
  %v736 = vadd.f32 %v735, 1.0
  %v737 = vrcp.pop %v736
  %v738 = vmul.f32 1.0, %v737
  %v740 = vrot.slane %v732, 2
  %v742 = vtanh.pop %v740
  %743 = vrot.lane.b32.xlu0 %v732, 64
  %v744 = vpop.permute.xlu0 %743
  %v745 = vrot.slane %v744, 2
  %v747 = vxor.u32 %v745, 2147483648
  %v748 = vmul.f32 %v747, 1.442695
  %v749 = vpow.pop %v748
  %v750 = vadd.f32 %v749, 1.0
  %v751 = vrcp.pop %v750
  %v752 = vmul.f32 1.0, %v751
  %v753 = vmul.f32 %v738, %v636
  %v754 = vmul.f32 %v738, %v742
  %756 = vrot.lane.b32.xlu0 %v754, 64
  %v757 = vpop.permute.xlu0 %756
  %v759 = vadd.f32 %v753, %v757
  %v760 = vtanh.pop %v759
  %762 = vrot.lane.b32.xlu0 %v760, 64
  %v763 = vpop.permute.xlu0 %762
  %v765 = vmul.f32 %v752, %v763
  %s766 = scalar_lea.vmem %s2, 10
  %767 = vst.msk [vmem:[%s766] sm:$0x3] %vm151, %v765
  %s768 = scalar_lea.vmem %s0, 24
  %v769 = vld [vmem:[%s768] sm:$0xf]
  %v771 = vsel %vm31, %v765, 0
  %773 = vmatprep.subr.mxu0 %v15
  %774 = vmatpush1.msra.mxu0 %v14
  %775 = vmatprep.subr.mxu0 %v17
  %776 = vmatpush1.msra.mxu0 %v16
  %777 = vmatprep.subr.mxu0 %v19
  %778 = vmatpush1.msra.mxu0 %v18
  %779 = vmatprep.subr.mxu0 %v21
  %780 = vmatpush1.msra.mxu0 %v20
  %781 = vmatprep.subr.mxu0 %v23
  %782 = vmatpush1.msra.mxu0 %v22
  %783 = vmatprep.subr.mxu0 %v25
  %784 = vmatpush1.msra.mxu0 %v24
  %785 = vmatprep.subr.mxu0 %v27
  %786 = vmatpush1.msra.mxu0 %v26
  %787 = vmatprep.subr.mxu0 %v29
  %788 = vmatpush1.msra.mxu0 %v28
  %789 = vmatprep.subr.mxu0 0.0
  %790 = vmatpush1.msra.mxu0 0.0
  %791 = vmatprep.subr.mxu0 0.0
  %792 = vmatpush1.msra.mxu0 0.0
  %793 = vmatprep.subr.mxu0 0.0
  %794 = vmatpush1.msra.mxu0 0.0
  %795 = vmatprep.subr.mxu0 0.0
  %796 = vmatpush1.msra.mxu0 0.0
  %797 = vmatprep.subr.mxu0 0.0
  %798 = vmatpush1.msra.mxu0 0.0
  %799 = vmatprep.subr.mxu0 0.0
  %800 = vmatpush1.msra.mxu0 0.0
  %801 = vmatprep.subr.mxu0 0.0
  %802 = vmatpush1.msra.mxu0 0.0
  %803 = vmatprep.subr.mxu0 0.0
  %804 = vmatpush1.msra.mxu0 0.0
  %805 = vmatprep.subr.mxu0 0.0
  %806 = vmatpush1.msra.mxu0 0.0
  %807 = vmatprep.subr.mxu0 0.0
  %808 = vmatpush1.msra.mxu0 0.0
  %809 = vmatprep.subr.mxu0 0.0
  %810 = vmatpush1.msra.mxu0 0.0
  %811 = vmatprep.subr.mxu0 0.0
  %812 = vmatpush1.msra.mxu0 0.0
  %813 = vmatprep.subr.mxu0 0.0
  %814 = vmatpush1.msra.mxu0 0.0
  %815 = vmatprep.subr.mxu0 0.0
  %816 = vmatpush1.msra.mxu0 0.0
  %817 = vmatprep.subr.mxu0 0.0
  %818 = vmatpush1.msra.mxu0 0.0
  %819 = vmatprep.subr.mxu0 0.0
  %820 = vmatpush1.msra.mxu0 0.0
  %821 = vmatprep.subr.mxu0 0.0
  %822 = vmatpush1.msra.mxu0 0.0
  %823 = vmatprep.subr.mxu0 0.0
  %824 = vmatpush1.msra.mxu0 0.0
  %825 = vmatprep.subr.mxu0 0.0
  %826 = vmatpush1.msra.mxu0 0.0
  %827 = vmatprep.subr.mxu0 0.0
  %828 = vmatpush1.msra.mxu0 0.0
  %829 = vmatprep.subr.mxu0 0.0
  %830 = vmatpush1.msra.mxu0 0.0
  %831 = vmatprep.subr.mxu0 0.0
  %832 = vmatpush1.msra.mxu0 0.0
  %833 = vmatprep.subr.mxu0 0.0
  %834 = vmatpush1.msra.mxu0 0.0
  %835 = vmatprep.subr.mxu0 0.0
  %836 = vmatpush1.msra.mxu0 0.0
  %837 = vmatprep.mubr.f32.mxu0 0.0
  %838 = vmatmul.mubr.f32.gmra.mrb[0].mxu0 %v771
  %v839 = vpop.f32.mrb[0].mxu0
  %v840 = vadd.f32 0.0, %v839
  %v841 = vpop.f32.mrb[0].mxu0
  %v842 = vadd.f32 0.0, %v841
  %843 = vdwg.mxu0
  %v846 = vcombine.low %v840, %v842
  %v848 = vunpack.c.l.s4 1983009808
  %v849 = vunpack.c.0.s8 %v848
  %v850 = vlaneseq
  %v851 = vshrl.u32 %v850, 7
  %v852 = vsub.s32 %v849, %v851
  %v853 = vrot.slane %v846, %v852
  %v855 = vadd.f32 %v769, %v853
  %v856 = vxor.u32 %v855, 2147483648
  %v857 = vmul.f32 %v856, 1.442695
  %v858 = vpow.pop %v857
  %v859 = vadd.f32 %v858, 1.0
  %v860 = vrcp.pop %v859
  %v861 = vmul.f32 1.0, %v860
  %v863 = vrot.slane %v855, 2
  %v865 = vtanh.pop %v863
  %866 = vrot.lane.b32.xlu0 %v855, 64
  %v867 = vpop.permute.xlu0 %866
  %v868 = vrot.slane %v867, 2
  %v870 = vxor.u32 %v868, 2147483648
  %v871 = vmul.f32 %v870, 1.442695
  %v872 = vpow.pop %v871
  %v873 = vadd.f32 %v872, 1.0
  %v874 = vrcp.pop %v873
  %v875 = vmul.f32 1.0, %v874
  %v876 = vmul.f32 %v861, %v759
  %v877 = vmul.f32 %v861, %v865
  %879 = vrot.lane.b32.xlu0 %v877, 64
  %v880 = vpop.permute.xlu0 %879
  %v882 = vadd.f32 %v876, %v880
  %v883 = vtanh.pop %v882
  %885 = vrot.lane.b32.xlu0 %v883, 64
  %v886 = vpop.permute.xlu0 %885
  %v888 = vmul.f32 %v875, %v886
  %s889 = scalar_lea.vmem %s2, 12
  %890 = vst.msk [vmem:[%s889] sm:$0x3] %vm151, %v888
  %s891 = scalar_lea.vmem %s0, 28
  %v892 = vld [vmem:[%s891] sm:$0xf]
  %v894 = vsel %vm31, %v888, 0
  %896 = vmatprep.subr.mxu0 %v15
  %897 = vmatpush1.msra.mxu0 %v14
  %898 = vmatprep.subr.mxu0 %v17
  %899 = vmatpush1.msra.mxu0 %v16
  %900 = vmatprep.subr.mxu0 %v19
  %901 = vmatpush1.msra.mxu0 %v18
  %902 = vmatprep.subr.mxu0 %v21
  %903 = vmatpush1.msra.mxu0 %v20
  %904 = vmatprep.subr.mxu0 %v23
  %905 = vmatpush1.msra.mxu0 %v22
  %906 = vmatprep.subr.mxu0 %v25
  %907 = vmatpush1.msra.mxu0 %v24
  %908 = vmatprep.subr.mxu0 %v27
  %909 = vmatpush1.msra.mxu0 %v26
  %910 = vmatprep.subr.mxu0 %v29
  %911 = vmatpush1.msra.mxu0 %v28
  %912 = vmatprep.subr.mxu0 0.0
  %913 = vmatpush1.msra.mxu0 0.0
  %914 = vmatprep.subr.mxu0 0.0
  %915 = vmatpush1.msra.mxu0 0.0
  %916 = vmatprep.subr.mxu0 0.0
  %917 = vmatpush1.msra.mxu0 0.0
  %918 = vmatprep.subr.mxu0 0.0
  %919 = vmatpush1.msra.mxu0 0.0
  %920 = vmatprep.subr.mxu0 0.0
  %921 = vmatpush1.msra.mxu0 0.0
  %922 = vmatprep.subr.mxu0 0.0
  %923 = vmatpush1.msra.mxu0 0.0
  %924 = vmatprep.subr.mxu0 0.0
  %925 = vmatpush1.msra.mxu0 0.0
  %926 = vmatprep.subr.mxu0 0.0
  %927 = vmatpush1.msra.mxu0 0.0
  %928 = vmatprep.subr.mxu0 0.0
  %929 = vmatpush1.msra.mxu0 0.0
  %930 = vmatprep.subr.mxu0 0.0
  %931 = vmatpush1.msra.mxu0 0.0
  %932 = vmatprep.subr.mxu0 0.0
  %933 = vmatpush1.msra.mxu0 0.0
  %934 = vmatprep.subr.mxu0 0.0
  %935 = vmatpush1.msra.mxu0 0.0
  %936 = vmatprep.subr.mxu0 0.0
  %937 = vmatpush1.msra.mxu0 0.0
  %938 = vmatprep.subr.mxu0 0.0
  %939 = vmatpush1.msra.mxu0 0.0
  %940 = vmatprep.subr.mxu0 0.0
  %941 = vmatpush1.msra.mxu0 0.0
  %942 = vmatprep.subr.mxu0 0.0
  %943 = vmatpush1.msra.mxu0 0.0
  %944 = vmatprep.subr.mxu0 0.0
  %945 = vmatpush1.msra.mxu0 0.0
  %946 = vmatprep.subr.mxu0 0.0
  %947 = vmatpush1.msra.mxu0 0.0
  %948 = vmatprep.subr.mxu0 0.0
  %949 = vmatpush1.msra.mxu0 0.0
  %950 = vmatprep.subr.mxu0 0.0
  %951 = vmatpush1.msra.mxu0 0.0
  %952 = vmatprep.subr.mxu0 0.0
  %953 = vmatpush1.msra.mxu0 0.0
  %954 = vmatprep.subr.mxu0 0.0
  %955 = vmatpush1.msra.mxu0 0.0
  %956 = vmatprep.subr.mxu0 0.0
  %957 = vmatpush1.msra.mxu0 0.0
  %958 = vmatprep.subr.mxu0 0.0
  %959 = vmatpush1.msra.mxu0 0.0
  %960 = vmatprep.mubr.f32.mxu0 0.0
  %961 = vmatmul.mubr.f32.gmra.mrb[0].mxu0 %v894
  %v962 = vpop.f32.mrb[0].mxu0
  %v963 = vadd.f32 0.0, %v962
  %v964 = vpop.f32.mrb[0].mxu0
  %v965 = vadd.f32 0.0, %v964
  %966 = vdwg.mxu0
  %v969 = vcombine.low %v963, %v965
  %v971 = vunpack.c.l.s4 1983009808
  %v972 = vunpack.c.0.s8 %v971
  %v973 = vlaneseq
  %v974 = vshrl.u32 %v973, 7
  %v975 = vsub.s32 %v972, %v974
  %v976 = vrot.slane %v969, %v975
  %v978 = vadd.f32 %v892, %v976
  %v979 = vxor.u32 %v978, 2147483648
  %v980 = vmul.f32 %v979, 1.442695
  %v981 = vpow.pop %v980
  %v982 = vadd.f32 %v981, 1.0
  %v983 = vrcp.pop %v982
  %v984 = vmul.f32 1.0, %v983
  %v986 = vrot.slane %v978, 2
  %v988 = vtanh.pop %v986
  %989 = vrot.lane.b32.xlu0 %v978, 64
  %v990 = vpop.permute.xlu0 %989
  %v991 = vrot.slane %v990, 2
  %v993 = vxor.u32 %v991, 2147483648
  %v994 = vmul.f32 %v993, 1.442695
  %v995 = vpow.pop %v994
  %v996 = vadd.f32 %v995, 1.0
  %v997 = vrcp.pop %v996
  %v998 = vmul.f32 1.0, %v997
  %v999 = vmul.f32 %v984, %v882
  %v1000 = vmul.f32 %v984, %v988
  %1002 = vrot.lane.b32.xlu0 %v1000, 64
  %v1003 = vpop.permute.xlu0 %1002
  %v1005 = vadd.f32 %v999, %v1003
  %v1006 = vtanh.pop %v1005
  %1008 = vrot.lane.b32.xlu0 %v1006, 64
  %v1009 = vpop.permute.xlu0 %1008
  %v1011 = vmul.f32 %v998, %v1009
  %s1012 = scalar_lea.vmem %s2, 14
  %1013 = vst.msk [vmem:[%s1012] sm:$0x3] %vm151, %v1011
  %1014 = vst.msk [vmem:[%s3] sm:$0x3] %vm151, %v1011
  %v1017 = vunpack.c.l.s4 1983009808
  %v1018 = vunpack.c.0.s8 %v1017
  %v1019 = vlaneseq
  %v1020 = vshrl.u32 %v1019, 7
  %v1021 = vsub.s32 %v1018, %v1020
  %v1022 = vrot.slane %v1005, %v1021
  %1023 = vrot.lane.b32.xlu0 %v1022, 64
  %v1024 = vpop.permute.xlu0 %1023
  %1026 = vst.msk [vmem:[%s4] sm:$0x3] %vm151, %v1024
  // Predicated region
  $region10: #{encoder_forward.2} parent=0 // pred_check
    _
  $region11: #{encoder_forward.2} parent=0 // pred_check_branch
    %1028 = sbr.rel (0) target = $region13
  $region12: #{encoder_forward.2} parent=0 // pred_region
    _
  $region13: #{encoder_forward.2} parent=0 // pred_fallthru
    _
  // Predicated region
  $region14: #{encoder_forward.2} parent=0 // pred_check
    _
  $region15: #{encoder_forward.2} parent=0 // pred_check_branch
    %1030 = sbr.rel (0) target = $region17
  $region16: #{encoder_forward.2} parent=0 // pred_region
    _
  $region17: #{encoder_forward.2} parent=0 // pred_fallthru
    _
  // Predicated region
  $region18: #{encoder_forward.2} parent=0 // pred_check
    _
  $region19: #{encoder_forward.2} parent=0 // pred_check_branch
    %1032 = sbr.rel (0) target = $region21
  $region20: #{encoder_forward.2} parent=0 // pred_region
    _
  $region21: #{encoder_forward.2} parent=0 // pred_fallthru
    _
  // Predicated region
  $region22: #{encoder_forward.2} parent=0 // pred_check
    _
  $region23: #{encoder_forward.2} parent=0 // pred_check_branch
    %1034 = sbr.rel (0) target = $region25
  $region24: #{encoder_forward.2} parent=0 // pred_region
    _
  $region25: #{encoder_forward.2} parent=0 // pred_fallthru
    _
  // Predicated region
  $region26: #{encoder_forward.2} parent=0 // pred_check
    _
  $region27: #{encoder_forward.2} parent=0 // pred_check_branch
    %1036 = sbr.rel (0) target = $region29
  $region28: #{encoder_forward.2} parent=0 // pred_region
    _
  $region29: #{encoder_forward.2} parent=0 // pred_fallthru
    _
  // Predicated region
  $region30: #{encoder_forward.2} parent=0 // pred_check
    _
  $region31: #{encoder_forward.2} parent=0 // pred_check_branch
    %1038 = sbr.rel (0) target = $region33
  $region32: #{encoder_forward.2} parent=0 // pred_region
    _
  $region33: #{encoder_forward.2} parent=0 // pred_fallthru
    _

// kernel: encoder_forward.3
$region0: #{encoder_forward.3}
  #allocation0 [shape = 'u32[]', space=smem, size = 0x4, offset = 0x4, fixed_abs, tag = 'smem constant byte address 0x4 - core index']
  #allocation1 [shape = 'u32[144,128]{1,0:T(1,128)}', space=vmem, size = 0x12000, scoped, tag = 'internal scratch']
  %s0 = inlined_call_operand.vmem [shape: f32[8,2,256], index: 0, kind: input, shape index: {}]
  %s1 = inlined_call_operand.vmem [shape: f32[64,256], index: 1, kind: input, shape index: {}]
  %s2 = inlined_call_operand.hbm [shape: f32[8,2,64], index: 2, kind: output, shape index: {0}]
  %s3 = inlined_call_operand.vmem [shape: f32[2,64], index: 3, kind: output, shape index: {1}]
  %s4 = inlined_call_operand.vmem [shape: f32[2,64], index: 4, kind: output, shape index: {2}]
  %5 = xla_tuple %s2, %s3, %s4
  %s6 = sld [smem:[#allocation0]]
  $region34: #{encoder_forward.3} parent=0
    _
  %s8 = ssub.s32 1, %s6
  %s9 = scalar_select 0, %s8, %s6
  $region1: #{encoder_forward.3} parent=0
    #allocation2 [shape = 'u8[8192]{0}', space=vmem, size = 0x2000, scoped, tag = 'output window, operand 0, single buffered']
    #allocation3 [shape = 's32[1]{0}', space=sflag, size = 0x4, scoped, tag = 'scoped memory for encoder_forward.3']
    %10 = vsyncpa [#allocation3], 0
    // Predicated region
    $region2: #{encoder_forward.3} parent=1 // pred_check
      _
    $region3: #{encoder_forward.3} parent=1 // pred_check_branch
      %12 = sbr.rel (0) target = $region5
    $region4: #{encoder_forward.3} parent=1 // pred_region
      _
    $region5: #{encoder_forward.3} parent=1 // pred_fallthru
      _
    // Predicated region
    $region6: #{encoder_forward.3} parent=1 // pred_check
      _
    $region7: #{encoder_forward.3} parent=1 // pred_check_branch
      %14 = sbr.rel (0) target = $region9
    $region8: #{encoder_forward.3} parent=1 // pred_region
      _
    $region9: #{encoder_forward.3} parent=1 // pred_fallthru
      _
    %v15 = vld [vmem:[%s1] sm:$0xff]
    %v16 = vld [vmem:[%s1 + $0x8] sm:$0xff]
    %v17 = vld [vmem:[%s1 + $0x10] sm:$0xff]
    %v18 = vld [vmem:[%s1 + $0x18] sm:$0xff]
    %v19 = vld [vmem:[%s1 + $0x20] sm:$0xff]
    %v20 = vld [vmem:[%s1 + $0x28] sm:$0xff]
    %v21 = vld [vmem:[%s1 + $0x30] sm:$0xff]
    %v22 = vld [vmem:[%s1 + $0x38] sm:$0xff]
    %v23 = vld [vmem:[%s1 + $0x40] sm:$0xff]
    %v24 = vld [vmem:[%s1 + $0x48] sm:$0xff]
    %v25 = vld [vmem:[%s1 + $0x50] sm:$0xff]
    %v26 = vld [vmem:[%s1 + $0x58] sm:$0xff]
    %v27 = vld [vmem:[%s1 + $0x60] sm:$0xff]
    %v28 = vld [vmem:[%s1 + $0x68] sm:$0xff]
    %v29 = vld [vmem:[%s1 + $0x70] sm:$0xff]
    %v30 = vld [vmem:[%s1 + $0x78] sm:$0xff]
    %v31 = vld [vmem:[%s0] sm:$0xf]
    %vm32 = vcmask 523264
    %v34 = vsel %vm32, 0.0, 0
    %36 = vmatprep.subr.mxu0 %v16
    %37 = vmatpush1.msra.mxu0 %v15
    %38 = vmatprep.subr.mxu0 %v18
    %39 = vmatpush1.msra.mxu0 %v17
    %40 = vmatprep.subr.mxu0 %v20
    %41 = vmatpush1.msra.mxu0 %v19
    %42 = vmatprep.subr.mxu0 %v22
    %43 = vmatpush1.msra.mxu0 %v21
    %44 = vmatprep.subr.mxu0 %v24
    %45 = vmatpush1.msra.mxu0 %v23
    %46 = vmatprep.subr.mxu0 %v26
    %47 = vmatpush1.msra.mxu0 %v25
    %48 = vmatprep.subr.mxu0 %v28
    %49 = vmatpush1.msra.mxu0 %v27
    %50 = vmatprep.subr.mxu0 %v30
    %51 = vmatpush1.msra.mxu0 %v29
    %52 = vmatprep.subr.mxu0 0.0
    %53 = vmatpush1.msra.mxu0 0.0
    %54 = vmatprep.subr.mxu0 0.0
    %55 = vmatpush1.msra.mxu0 0.0
    %56 = vmatprep.subr.mxu0 0.0
    %57 = vmatpush1.msra.mxu0 0.0
    %58 = vmatprep.subr.mxu0 0.0
    %59 = vmatpush1.msra.mxu0 0.0
    %60 = vmatprep.subr.mxu0 0.0
    %61 = vmatpush1.msra.mxu0 0.0
    %62 = vmatprep.subr.mxu0 0.0
    %63 = vmatpush1.msra.mxu0 0.0
    %64 = vmatprep.subr.mxu0 0.0
    %65 = vmatpush1.msra.mxu0 0.0
    %66 = vmatprep.subr.mxu0 0.0
    %67 = vmatpush1.msra.mxu0 0.0
    %68 = vmatprep.subr.mxu0 0.0
    %69 = vmatpush1.msra.mxu0 0.0
    %70 = vmatprep.subr.mxu0 0.0
    %71 = vmatpush1.msra.mxu0 0.0
    %72 = vmatprep.subr.mxu0 0.0
    %73 = vmatpush1.msra.mxu0 0.0
    %74 = vmatprep.subr.mxu0 0.0
    %75 = vmatpush1.msra.mxu0 0.0
    %76 = vmatprep.subr.mxu0 0.0
    %77 = vmatpush1.msra.mxu0 0.0
    %78 = vmatprep.subr.mxu0 0.0
    %79 = vmatpush1.msra.mxu0 0.0
    %80 = vmatprep.subr.mxu0 0.0
    %81 = vmatpush1.msra.mxu0 0.0
    %82 = vmatprep.subr.mxu0 0.0
    %83 = vmatpush1.msra.mxu0 0.0
    %84 = vmatprep.subr.mxu0 0.0
    %85 = vmatpush1.msra.mxu0 0.0
    %86 = vmatprep.subr.mxu0 0.0
    %87 = vmatpush1.msra.mxu0 0.0
    %88 = vmatprep.subr.mxu0 0.0
    %89 = vmatpush1.msra.mxu0 0.0
    %90 = vmatprep.subr.mxu0 0.0
    %91 = vmatpush1.msra.mxu0 0.0
    %92 = vmatprep.subr.mxu0 0.0
    %93 = vmatpush1.msra.mxu0 0.0
    %94 = vmatprep.subr.mxu0 0.0
    %95 = vmatpush1.msra.mxu0 0.0
    %96 = vmatprep.subr.mxu0 0.0
    %97 = vmatpush1.msra.mxu0 0.0
    %98 = vmatprep.subr.mxu0 0.0
    %99 = vmatpush1.msra.mxu0 0.0
    %100 = vmatprep.mubr.f32.mxu0 0.0
    %101 = vmatmul.mubr.f32.gmra.mrb[0].mxu0 %v34
    %v102 = vpop.f32.mrb[0].mxu0
    %v103 = vadd.f32 0.0, %v102
    %v104 = vpop.f32.mrb[0].mxu0
    %v105 = vadd.f32 0.0, %v104
    %106 = vdwg.mxu0
    %v109 = vcombine.low %v103, %v105
    %v111 = vunpack.c.l.s4 1983009808
    %v112 = vunpack.c.0.s8 %v111
    %v113 = vlaneseq
    %v114 = vshrl.u32 %v113, 7
    %v115 = vsub.s32 %v112, %v114
    %v116 = vrot.slane %v109, %v115
    %v118 = vadd.f32 %v31, %v116
    %v119 = vxor.u32 %v118, 2147483648
    %v120 = vmul.f32 %v119, 1.442695
    %v121 = vpow.pop %v120
    %v122 = vadd.f32 %v121, 1.0
    %v123 = vrcp.pop %v122
    %v124 = vmul.f32 1.0, %v123
    %v126 = vrot.slane %v118, 2
    %v128 = vtanh.pop %v126
    %129 = vrot.lane.b32.xlu0 %v118, 64
    %v130 = vpop.permute.xlu0 %129
    %v131 = vrot.slane %v130, 2
    %v133 = vxor.u32 %v131, 2147483648
    %v134 = vmul.f32 %v133, 1.442695
    %v135 = vpow.pop %v134
    %v136 = vadd.f32 %v135, 1.0
    %v137 = vrcp.pop %v136
    %v138 = vmul.f32 1.0, %v137
    %v139 = vmul.f32 %v124, 0.0
    %v140 = vmul.f32 %v124, %v128
    %142 = vrot.lane.b32.xlu0 %v140, 64
    %v143 = vpop.permute.xlu0 %142
    %v145 = vadd.f32 %v139, %v143
    %v146 = vtanh.pop %v145
    %148 = vrot.lane.b32.xlu0 %v146, 64
    %v149 = vpop.permute.xlu0 %148
    %v151 = vmul.f32 %v138, %v149
    %vm152 = vcmask 517120
    %153 = vst.msk [vmem:[#allocation2] sm:$0x3] %vm152, %v151
    %s154 = scalar_lea.vmem %s0, 4
    %v155 = vld [vmem:[%s154] sm:$0xf]
    %v157 = vsel %vm32, %v151, 0
    %159 = vmatprep.subr.mxu0 %v16
    %160 = vmatpush1.msra.mxu0 %v15
    %161 = vmatprep.subr.mxu0 %v18
    %162 = vmatpush1.msra.mxu0 %v17
    %163 = vmatprep.subr.mxu0 %v20
    %164 = vmatpush1.msra.mxu0 %v19
    %165 = vmatprep.subr.mxu0 %v22
    %166 = vmatpush1.msra.mxu0 %v21
    %167 = vmatprep.subr.mxu0 %v24
    %168 = vmatpush1.msra.mxu0 %v23
    %169 = vmatprep.subr.mxu0 %v26
    %170 = vmatpush1.msra.mxu0 %v25
    %171 = vmatprep.subr.mxu0 %v28
    %172 = vmatpush1.msra.mxu0 %v27
    %173 = vmatprep.subr.mxu0 %v30
    %174 = vmatpush1.msra.mxu0 %v29
    %175 = vmatprep.subr.mxu0 0.0
    %176 = vmatpush1.msra.mxu0 0.0
    %177 = vmatprep.subr.mxu0 0.0
    %178 = vmatpush1.msra.mxu0 0.0
    %179 = vmatprep.subr.mxu0 0.0
    %180 = vmatpush1.msra.mxu0 0.0
    %181 = vmatprep.subr.mxu0 0.0
    %182 = vmatpush1.msra.mxu0 0.0
    %183 = vmatprep.subr.mxu0 0.0
    %184 = vmatpush1.msra.mxu0 0.0
    %185 = vmatprep.subr.mxu0 0.0
    %186 = vmatpush1.msra.mxu0 0.0
    %187 = vmatprep.subr.mxu0 0.0
    %188 = vmatpush1.msra.mxu0 0.0
    %189 = vmatprep.subr.mxu0 0.0
    %190 = vmatpush1.msra.mxu0 0.0
    %191 = vmatprep.subr.mxu0 0.0
    %192 = vmatpush1.msra.mxu0 0.0
    %193 = vmatprep.subr.mxu0 0.0
    %194 = vmatpush1.msra.mxu0 0.0
    %195 = vmatprep.subr.mxu0 0.0
    %196 = vmatpush1.msra.mxu0 0.0
    %197 = vmatprep.subr.mxu0 0.0
    %198 = vmatpush1.msra.mxu0 0.0
    %199 = vmatprep.subr.mxu0 0.0
    %200 = vmatpush1.msra.mxu0 0.0
    %201 = vmatprep.subr.mxu0 0.0
    %202 = vmatpush1.msra.mxu0 0.0
    %203 = vmatprep.subr.mxu0 0.0
    %204 = vmatpush1.msra.mxu0 0.0
    %205 = vmatprep.subr.mxu0 0.0
    %206 = vmatpush1.msra.mxu0 0.0
    %207 = vmatprep.subr.mxu0 0.0
    %208 = vmatpush1.msra.mxu0 0.0
    %209 = vmatprep.subr.mxu0 0.0
    %210 = vmatpush1.msra.mxu0 0.0
    %211 = vmatprep.subr.mxu0 0.0
    %212 = vmatpush1.msra.mxu0 0.0
    %213 = vmatprep.subr.mxu0 0.0
    %214 = vmatpush1.msra.mxu0 0.0
    %215 = vmatprep.subr.mxu0 0.0
    %216 = vmatpush1.msra.mxu0 0.0
    %217 = vmatprep.subr.mxu0 0.0
    %218 = vmatpush1.msra.mxu0 0.0
    %219 = vmatprep.subr.mxu0 0.0
    %220 = vmatpush1.msra.mxu0 0.0
    %221 = vmatprep.subr.mxu0 0.0
    %222 = vmatpush1.msra.mxu0 0.0
    %223 = vmatprep.mubr.f32.mxu0 0.0
    %224 = vmatmul.mubr.f32.gmra.mrb[0].mxu0 %v157
    %v225 = vpop.f32.mrb[0].mxu0
    %v226 = vadd.f32 0.0, %v225
    %v227 = vpop.f32.mrb[0].mxu0
    %v228 = vadd.f32 0.0, %v227
    %229 = vdwg.mxu0
    %v232 = vcombine.low %v226, %v228
    %v234 = vunpack.c.l.s4 1983009808
    %v235 = vunpack.c.0.s8 %v234
    %v236 = vlaneseq
    %v237 = vshrl.u32 %v236, 7
    %v238 = vsub.s32 %v235, %v237
    %v239 = vrot.slane %v232, %v238
    %v241 = vadd.f32 %v155, %v239
    %v242 = vxor.u32 %v241, 2147483648
    %v243 = vmul.f32 %v242, 1.442695
    %v244 = vpow.pop %v243
    %v245 = vadd.f32 %v244, 1.0
    %v246 = vrcp.pop %v245
    %v247 = vmul.f32 1.0, %v246
    %v249 = vrot.slane %v241, 2
    %v251 = vtanh.pop %v249
    %252 = vrot.lane.b32.xlu0 %v241, 64
    %v253 = vpop.permute.xlu0 %252
    %v254 = vrot.slane %v253, 2
    %v256 = vxor.u32 %v254, 2147483648
    %v257 = vmul.f32 %v256, 1.442695
    %v258 = vpow.pop %v257
    %v259 = vadd.f32 %v258, 1.0
    %v260 = vrcp.pop %v259
    %v261 = vmul.f32 1.0, %v260
    %v262 = vmul.f32 %v247, %v145
    %v263 = vmul.f32 %v247, %v251
    %265 = vrot.lane.b32.xlu0 %v263, 64
    %v266 = vpop.permute.xlu0 %265
    %v268 = vadd.f32 %v262, %v266
    %v269 = vtanh.pop %v268
    %271 = vrot.lane.b32.xlu0 %v269, 64
    %v272 = vpop.permute.xlu0 %271
    %v274 = vmul.f32 %v261, %v272
    %s275 = scalar_lea.vmem [#allocation2], 2
    %276 = vst.msk [vmem:[%s275] sm:$0x3] %vm152, %v274
    %s277 = scalar_lea.vmem %s0, 8
    %v278 = vld [vmem:[%s277] sm:$0xf]
    %v280 = vsel %vm32, %v274, 0
    %282 = vmatprep.subr.mxu0 %v16
    %283 = vmatpush1.msra.mxu0 %v15
    %284 = vmatprep.subr.mxu0 %v18
    %285 = vmatpush1.msra.mxu0 %v17
    %286 = vmatprep.subr.mxu0 %v20
    %287 = vmatpush1.msra.mxu0 %v19
    %288 = vmatprep.subr.mxu0 %v22
    %289 = vmatpush1.msra.mxu0 %v21
    %290 = vmatprep.subr.mxu0 %v24
    %291 = vmatpush1.msra.mxu0 %v23
    %292 = vmatprep.subr.mxu0 %v26
    %293 = vmatpush1.msra.mxu0 %v25
    %294 = vmatprep.subr.mxu0 %v28
    %295 = vmatpush1.msra.mxu0 %v27
    %296 = vmatprep.subr.mxu0 %v30
    %297 = vmatpush1.msra.mxu0 %v29
    %298 = vmatprep.subr.mxu0 0.0
    %299 = vmatpush1.msra.mxu0 0.0
    %300 = vmatprep.subr.mxu0 0.0
    %301 = vmatpush1.msra.mxu0 0.0
    %302 = vmatprep.subr.mxu0 0.0
    %303 = vmatpush1.msra.mxu0 0.0
    %304 = vmatprep.subr.mxu0 0.0
    %305 = vmatpush1.msra.mxu0 0.0
    %306 = vmatprep.subr.mxu0 0.0
    %307 = vmatpush1.msra.mxu0 0.0
    %308 = vmatprep.subr.mxu0 0.0
    %309 = vmatpush1.msra.mxu0 0.0
    %310 = vmatprep.subr.mxu0 0.0
    %311 = vmatpush1.msra.mxu0 0.0
    %312 = vmatprep.subr.mxu0 0.0
    %313 = vmatpush1.msra.mxu0 0.0
    %314 = vmatprep.subr.mxu0 0.0
    %315 = vmatpush1.msra.mxu0 0.0
    %316 = vmatprep.subr.mxu0 0.0
    %317 = vmatpush1.msra.mxu0 0.0
    %318 = vmatprep.subr.mxu0 0.0
    %319 = vmatpush1.msra.mxu0 0.0
    %320 = vmatprep.subr.mxu0 0.0
    %321 = vmatpush1.msra.mxu0 0.0
    %322 = vmatprep.subr.mxu0 0.0
    %323 = vmatpush1.msra.mxu0 0.0
    %324 = vmatprep.subr.mxu0 0.0
    %325 = vmatpush1.msra.mxu0 0.0
    %326 = vmatprep.subr.mxu0 0.0
    %327 = vmatpush1.msra.mxu0 0.0
    %328 = vmatprep.subr.mxu0 0.0
    %329 = vmatpush1.msra.mxu0 0.0
    %330 = vmatprep.subr.mxu0 0.0
    %331 = vmatpush1.msra.mxu0 0.0
    %332 = vmatprep.subr.mxu0 0.0
    %333 = vmatpush1.msra.mxu0 0.0
    %334 = vmatprep.subr.mxu0 0.0
    %335 = vmatpush1.msra.mxu0 0.0
    %336 = vmatprep.subr.mxu0 0.0
    %337 = vmatpush1.msra.mxu0 0.0
    %338 = vmatprep.subr.mxu0 0.0
    %339 = vmatpush1.msra.mxu0 0.0
    %340 = vmatprep.subr.mxu0 0.0
    %341 = vmatpush1.msra.mxu0 0.0
    %342 = vmatprep.subr.mxu0 0.0
    %343 = vmatpush1.msra.mxu0 0.0
    %344 = vmatprep.subr.mxu0 0.0
    %345 = vmatpush1.msra.mxu0 0.0
    %346 = vmatprep.mubr.f32.mxu0 0.0
    %347 = vmatmul.mubr.f32.gmra.mrb[0].mxu0 %v280
    %v348 = vpop.f32.mrb[0].mxu0
    %v349 = vadd.f32 0.0, %v348
    %v350 = vpop.f32.mrb[0].mxu0
    %v351 = vadd.f32 0.0, %v350
    %352 = vdwg.mxu0
    %v355 = vcombine.low %v349, %v351
    %v357 = vunpack.c.l.s4 1983009808
    %v358 = vunpack.c.0.s8 %v357
    %v359 = vlaneseq
    %v360 = vshrl.u32 %v359, 7
    %v361 = vsub.s32 %v358, %v360
    %v362 = vrot.slane %v355, %v361
    %v364 = vadd.f32 %v278, %v362
    %v365 = vxor.u32 %v364, 2147483648
    %v366 = vmul.f32 %v365, 1.442695
    %v367 = vpow.pop %v366
    %v368 = vadd.f32 %v367, 1.0
    %v369 = vrcp.pop %v368
    %v370 = vmul.f32 1.0, %v369
    %v372 = vrot.slane %v364, 2
    %v374 = vtanh.pop %v372
    %375 = vrot.lane.b32.xlu0 %v364, 64
    %v376 = vpop.permute.xlu0 %375
    %v377 = vrot.slane %v376, 2
    %v379 = vxor.u32 %v377, 2147483648
    %v380 = vmul.f32 %v379, 1.442695
    %v381 = vpow.pop %v380
    %v382 = vadd.f32 %v381, 1.0
    %v383 = vrcp.pop %v382
    %v384 = vmul.f32 1.0, %v383
    %v385 = vmul.f32 %v370, %v268
    %v386 = vmul.f32 %v370, %v374
    %388 = vrot.lane.b32.xlu0 %v386, 64
    %v389 = vpop.permute.xlu0 %388
    %v391 = vadd.f32 %v385, %v389
    %v392 = vtanh.pop %v391
    %394 = vrot.lane.b32.xlu0 %v392, 64
    %v395 = vpop.permute.xlu0 %394
    %v397 = vmul.f32 %v384, %v395
    %s398 = scalar_lea.vmem [#allocation2], 4
    %399 = vst.msk [vmem:[%s398] sm:$0x3] %vm152, %v397
    %s400 = scalar_lea.vmem %s0, 12
    %v401 = vld [vmem:[%s400] sm:$0xf]
    %v403 = vsel %vm32, %v397, 0
    %405 = vmatprep.subr.mxu0 %v16
    %406 = vmatpush1.msra.mxu0 %v15
    %407 = vmatprep.subr.mxu0 %v18
    %408 = vmatpush1.msra.mxu0 %v17
    %409 = vmatprep.subr.mxu0 %v20
    %410 = vmatpush1.msra.mxu0 %v19
    %411 = vmatprep.subr.mxu0 %v22
    %412 = vmatpush1.msra.mxu0 %v21
    %413 = vmatprep.subr.mxu0 %v24
    %414 = vmatpush1.msra.mxu0 %v23
    %415 = vmatprep.subr.mxu0 %v26
    %416 = vmatpush1.msra.mxu0 %v25
    %417 = vmatprep.subr.mxu0 %v28
    %418 = vmatpush1.msra.mxu0 %v27
    %419 = vmatprep.subr.mxu0 %v30
    %420 = vmatpush1.msra.mxu0 %v29
    %421 = vmatprep.subr.mxu0 0.0
    %422 = vmatpush1.msra.mxu0 0.0
    %423 = vmatprep.subr.mxu0 0.0
    %424 = vmatpush1.msra.mxu0 0.0
    %425 = vmatprep.subr.mxu0 0.0
    %426 = vmatpush1.msra.mxu0 0.0
    %427 = vmatprep.subr.mxu0 0.0
    %428 = vmatpush1.msra.mxu0 0.0
    %429 = vmatprep.subr.mxu0 0.0
    %430 = vmatpush1.msra.mxu0 0.0
    %431 = vmatprep.subr.mxu0 0.0
    %432 = vmatpush1.msra.mxu0 0.0
    %433 = vmatprep.subr.mxu0 0.0
    %434 = vmatpush1.msra.mxu0 0.0
    %435 = vmatprep.subr.mxu0 0.0
    %436 = vmatpush1.msra.mxu0 0.0
    %437 = vmatprep.subr.mxu0 0.0
    %438 = vmatpush1.msra.mxu0 0.0
    %439 = vmatprep.subr.mxu0 0.0
    %440 = vmatpush1.msra.mxu0 0.0
    %441 = vmatprep.subr.mxu0 0.0
    %442 = vmatpush1.msra.mxu0 0.0
    %443 = vmatprep.subr.mxu0 0.0
    %444 = vmatpush1.msra.mxu0 0.0
    %445 = vmatprep.subr.mxu0 0.0
    %446 = vmatpush1.msra.mxu0 0.0
    %447 = vmatprep.subr.mxu0 0.0
    %448 = vmatpush1.msra.mxu0 0.0
    %449 = vmatprep.subr.mxu0 0.0
    %450 = vmatpush1.msra.mxu0 0.0
    %451 = vmatprep.subr.mxu0 0.0
    %452 = vmatpush1.msra.mxu0 0.0
    %453 = vmatprep.subr.mxu0 0.0
    %454 = vmatpush1.msra.mxu0 0.0
    %455 = vmatprep.subr.mxu0 0.0
    %456 = vmatpush1.msra.mxu0 0.0
    %457 = vmatprep.subr.mxu0 0.0
    %458 = vmatpush1.msra.mxu0 0.0
    %459 = vmatprep.subr.mxu0 0.0
    %460 = vmatpush1.msra.mxu0 0.0
    %461 = vmatprep.subr.mxu0 0.0
    %462 = vmatpush1.msra.mxu0 0.0
    %463 = vmatprep.subr.mxu0 0.0
    %464 = vmatpush1.msra.mxu0 0.0
    %465 = vmatprep.subr.mxu0 0.0
    %466 = vmatpush1.msra.mxu0 0.0
    %467 = vmatprep.subr.mxu0 0.0
    %468 = vmatpush1.msra.mxu0 0.0
    %469 = vmatprep.mubr.f32.mxu0 0.0
    %470 = vmatmul.mubr.f32.gmra.mrb[0].mxu0 %v403
    %v471 = vpop.f32.mrb[0].mxu0
    %v472 = vadd.f32 0.0, %v471
    %v473 = vpop.f32.mrb[0].mxu0
    %v474 = vadd.f32 0.0, %v473
    %475 = vdwg.mxu0
    %v478 = vcombine.low %v472, %v474
    %v480 = vunpack.c.l.s4 1983009808
    %v481 = vunpack.c.0.s8 %v480
    %v482 = vlaneseq
    %v483 = vshrl.u32 %v482, 7
    %v484 = vsub.s32 %v481, %v483
    %v485 = vrot.slane %v478, %v484
    %v487 = vadd.f32 %v401, %v485
    %v488 = vxor.u32 %v487, 2147483648
    %v489 = vmul.f32 %v488, 1.442695
    %v490 = vpow.pop %v489
    %v491 = vadd.f32 %v490, 1.0
    %v492 = vrcp.pop %v491
    %v493 = vmul.f32 1.0, %v492
    %v495 = vrot.slane %v487, 2
    %v497 = vtanh.pop %v495
    %498 = vrot.lane.b32.xlu0 %v487, 64
    %v499 = vpop.permute.xlu0 %498
    %v500 = vrot.slane %v499, 2
    %v502 = vxor.u32 %v500, 2147483648
    %v503 = vmul.f32 %v502, 1.442695
    %v504 = vpow.pop %v503
    %v505 = vadd.f32 %v504, 1.0
    %v506 = vrcp.pop %v505
    %v507 = vmul.f32 1.0, %v506
    %v508 = vmul.f32 %v493, %v391
    %v509 = vmul.f32 %v493, %v497
    %511 = vrot.lane.b32.xlu0 %v509, 64
    %v512 = vpop.permute.xlu0 %511
    %v514 = vadd.f32 %v508, %v512
    %v515 = vtanh.pop %v514
    %517 = vrot.lane.b32.xlu0 %v515, 64
    %v518 = vpop.permute.xlu0 %517
    %v520 = vmul.f32 %v507, %v518
    %s521 = scalar_lea.vmem [#allocation2], 6
    %522 = vst.msk [vmem:[%s521] sm:$0x3] %vm152, %v520
    %s523 = scalar_lea.vmem %s0, 16
    %v524 = vld [vmem:[%s523] sm:$0xf]
    %v526 = vsel %vm32, %v520, 0
    %528 = vmatprep.subr.mxu0 %v16
    %529 = vmatpush1.msra.mxu0 %v15
    %530 = vmatprep.subr.mxu0 %v18
    %531 = vmatpush1.msra.mxu0 %v17
    %532 = vmatprep.subr.mxu0 %v20
    %533 = vmatpush1.msra.mxu0 %v19
    %534 = vmatprep.subr.mxu0 %v22
    %535 = vmatpush1.msra.mxu0 %v21
    %536 = vmatprep.subr.mxu0 %v24
    %537 = vmatpush1.msra.mxu0 %v23
    %538 = vmatprep.subr.mxu0 %v26
    %539 = vmatpush1.msra.mxu0 %v25
    %540 = vmatprep.subr.mxu0 %v28
    %541 = vmatpush1.msra.mxu0 %v27
    %542 = vmatprep.subr.mxu0 %v30
    %543 = vmatpush1.msra.mxu0 %v29
    %544 = vmatprep.subr.mxu0 0.0
    %545 = vmatpush1.msra.mxu0 0.0
    %546 = vmatprep.subr.mxu0 0.0
    %547 = vmatpush1.msra.mxu0 0.0
    %548 = vmatprep.subr.mxu0 0.0
    %549 = vmatpush1.msra.mxu0 0.0
    %550 = vmatprep.subr.mxu0 0.0
    %551 = vmatpush1.msra.mxu0 0.0
    %552 = vmatprep.subr.mxu0 0.0
    %553 = vmatpush1.msra.mxu0 0.0
    %554 = vmatprep.subr.mxu0 0.0
    %555 = vmatpush1.msra.mxu0 0.0
    %556 = vmatprep.subr.mxu0 0.0
    %557 = vmatpush1.msra.mxu0 0.0
    %558 = vmatprep.subr.mxu0 0.0
    %559 = vmatpush1.msra.mxu0 0.0
    %560 = vmatprep.subr.mxu0 0.0
    %561 = vmatpush1.msra.mxu0 0.0
    %562 = vmatprep.subr.mxu0 0.0
    %563 = vmatpush1.msra.mxu0 0.0
    %564 = vmatprep.subr.mxu0 0.0
    %565 = vmatpush1.msra.mxu0 0.0
    %566 = vmatprep.subr.mxu0 0.0
    %567 = vmatpush1.msra.mxu0 0.0
    %568 = vmatprep.subr.mxu0 0.0
    %569 = vmatpush1.msra.mxu0 0.0
    %570 = vmatprep.subr.mxu0 0.0
    %571 = vmatpush1.msra.mxu0 0.0
    %572 = vmatprep.subr.mxu0 0.0
    %573 = vmatpush1.msra.mxu0 0.0
    %574 = vmatprep.subr.mxu0 0.0
    %575 = vmatpush1.msra.mxu0 0.0
    %576 = vmatprep.subr.mxu0 0.0
    %577 = vmatpush1.msra.mxu0 0.0
    %578 = vmatprep.subr.mxu0 0.0
    %579 = vmatpush1.msra.mxu0 0.0
    %580 = vmatprep.subr.mxu0 0.0
    %581 = vmatpush1.msra.mxu0 0.0
    %582 = vmatprep.subr.mxu0 0.0
    %583 = vmatpush1.msra.mxu0 0.0
    %584 = vmatprep.subr.mxu0 0.0
    %585 = vmatpush1.msra.mxu0 0.0
    %586 = vmatprep.subr.mxu0 0.0
    %587 = vmatpush1.msra.mxu0 0.0
    %588 = vmatprep.subr.mxu0 0.0
    %589 = vmatpush1.msra.mxu0 0.0
    %590 = vmatprep.subr.mxu0 0.0
    %591 = vmatpush1.msra.mxu0 0.0
    %592 = vmatprep.mubr.f32.mxu0 0.0
    %593 = vmatmul.mubr.f32.gmra.mrb[0].mxu0 %v526
    %v594 = vpop.f32.mrb[0].mxu0
    %v595 = vadd.f32 0.0, %v594
    %v596 = vpop.f32.mrb[0].mxu0
    %v597 = vadd.f32 0.0, %v596
    %598 = vdwg.mxu0
    %v601 = vcombine.low %v595, %v597
    %v603 = vunpack.c.l.s4 1983009808
    %v604 = vunpack.c.0.s8 %v603
    %v605 = vlaneseq
    %v606 = vshrl.u32 %v605, 7
    %v607 = vsub.s32 %v604, %v606
    %v608 = vrot.slane %v601, %v607
    %v610 = vadd.f32 %v524, %v608
    %v611 = vxor.u32 %v610, 2147483648
    %v612 = vmul.f32 %v611, 1.442695
    %v613 = vpow.pop %v612
    %v614 = vadd.f32 %v613, 1.0
    %v615 = vrcp.pop %v614
    %v616 = vmul.f32 1.0, %v615
    %v618 = vrot.slane %v610, 2
    %v620 = vtanh.pop %v618
    %621 = vrot.lane.b32.xlu0 %v610, 64
    %v622 = vpop.permute.xlu0 %621
    %v623 = vrot.slane %v622, 2
    %v625 = vxor.u32 %v623, 2147483648
    %v626 = vmul.f32 %v625, 1.442695
    %v627 = vpow.pop %v626
    %v628 = vadd.f32 %v627, 1.0
    %v629 = vrcp.pop %v628
    %v630 = vmul.f32 1.0, %v629
    %v631 = vmul.f32 %v616, %v514
    %v632 = vmul.f32 %v616, %v620
    %634 = vrot.lane.b32.xlu0 %v632, 64
    %v635 = vpop.permute.xlu0 %634
    %v637 = vadd.f32 %v631, %v635
    %v638 = vtanh.pop %v637
    %640 = vrot.lane.b32.xlu0 %v638, 64
    %v641 = vpop.permute.xlu0 %640
    %v643 = vmul.f32 %v630, %v641
    %s644 = scalar_lea.vmem [#allocation2], 8
    %645 = vst.msk [vmem:[%s644] sm:$0x3] %vm152, %v643
    %s646 = scalar_lea.vmem %s0, 20
    %v647 = vld [vmem:[%s646] sm:$0xf]
    %v649 = vsel %vm32, %v643, 0
    %651 = vmatprep.subr.mxu0 %v16
    %652 = vmatpush1.msra.mxu0 %v15
    %653 = vmatprep.subr.mxu0 %v18
    %654 = vmatpush1.msra.mxu0 %v17
    %655 = vmatprep.subr.mxu0 %v20
    %656 = vmatpush1.msra.mxu0 %v19
    %657 = vmatprep.subr.mxu0 %v22
    %658 = vmatpush1.msra.mxu0 %v21
    %659 = vmatprep.subr.mxu0 %v24
    %660 = vmatpush1.msra.mxu0 %v23
    %661 = vmatprep.subr.mxu0 %v26
    %662 = vmatpush1.msra.mxu0 %v25
    %663 = vmatprep.subr.mxu0 %v28
    %664 = vmatpush1.msra.mxu0 %v27
    %665 = vmatprep.subr.mxu0 %v30
    %666 = vmatpush1.msra.mxu0 %v29
    %667 = vmatprep.subr.mxu0 0.0
    %668 = vmatpush1.msra.mxu0 0.0
    %669 = vmatprep.subr.mxu0 0.0
    %670 = vmatpush1.msra.mxu0 0.0
    %671 = vmatprep.subr.mxu0 0.0
    %672 = vmatpush1.msra.mxu0 0.0
    %673 = vmatprep.subr.mxu0 0.0
    %674 = vmatpush1.msra.mxu0 0.0
    %675 = vmatprep.subr.mxu0 0.0
    %676 = vmatpush1.msra.mxu0 0.0
    %677 = vmatprep.subr.mxu0 0.0
    %678 = vmatpush1.msra.mxu0 0.0
    %679 = vmatprep.subr.mxu0 0.0
    %680 = vmatpush1.msra.mxu0 0.0
    %681 = vmatprep.subr.mxu0 0.0
    %682 = vmatpush1.msra.mxu0 0.0
    %683 = vmatprep.subr.mxu0 0.0
    %684 = vmatpush1.msra.mxu0 0.0
    %685 = vmatprep.subr.mxu0 0.0
    %686 = vmatpush1.msra.mxu0 0.0
    %687 = vmatprep.subr.mxu0 0.0
    %688 = vmatpush1.msra.mxu0 0.0
    %689 = vmatprep.subr.mxu0 0.0
    %690 = vmatpush1.msra.mxu0 0.0
    %691 = vmatprep.subr.mxu0 0.0
    %692 = vmatpush1.msra.mxu0 0.0
    %693 = vmatprep.subr.mxu0 0.0
    %694 = vmatpush1.msra.mxu0 0.0
    %695 = vmatprep.subr.mxu0 0.0
    %696 = vmatpush1.msra.mxu0 0.0
    %697 = vmatprep.subr.mxu0 0.0
    %698 = vmatpush1.msra.mxu0 0.0
    %699 = vmatprep.subr.mxu0 0.0
    %700 = vmatpush1.msra.mxu0 0.0
    %701 = vmatprep.subr.mxu0 0.0
    %702 = vmatpush1.msra.mxu0 0.0
    %703 = vmatprep.subr.mxu0 0.0
    %704 = vmatpush1.msra.mxu0 0.0
    %705 = vmatprep.subr.mxu0 0.0
    %706 = vmatpush1.msra.mxu0 0.0
    %707 = vmatprep.subr.mxu0 0.0
    %708 = vmatpush1.msra.mxu0 0.0
    %709 = vmatprep.subr.mxu0 0.0
    %710 = vmatpush1.msra.mxu0 0.0
    %711 = vmatprep.subr.mxu0 0.0
    %712 = vmatpush1.msra.mxu0 0.0
    %713 = vmatprep.subr.mxu0 0.0
    %714 = vmatpush1.msra.mxu0 0.0
    %715 = vmatprep.mubr.f32.mxu0 0.0
    %716 = vmatmul.mubr.f32.gmra.mrb[0].mxu0 %v649
    %v717 = vpop.f32.mrb[0].mxu0
    %v718 = vadd.f32 0.0, %v717
    %v719 = vpop.f32.mrb[0].mxu0
    %v720 = vadd.f32 0.0, %v719
    %721 = vdwg.mxu0
    %v724 = vcombine.low %v718, %v720
    %v726 = vunpack.c.l.s4 1983009808
    %v727 = vunpack.c.0.s8 %v726
    %v728 = vlaneseq
    %v729 = vshrl.u32 %v728, 7
    %v730 = vsub.s32 %v727, %v729
    %v731 = vrot.slane %v724, %v730
    %v733 = vadd.f32 %v647, %v731
    %v734 = vxor.u32 %v733, 2147483648
    %v735 = vmul.f32 %v734, 1.442695
    %v736 = vpow.pop %v735
    %v737 = vadd.f32 %v736, 1.0
    %v738 = vrcp.pop %v737
    %v739 = vmul.f32 1.0, %v738
    %v741 = vrot.slane %v733, 2
    %v743 = vtanh.pop %v741
    %744 = vrot.lane.b32.xlu0 %v733, 64
    %v745 = vpop.permute.xlu0 %744
    %v746 = vrot.slane %v745, 2
    %v748 = vxor.u32 %v746, 2147483648
    %v749 = vmul.f32 %v748, 1.442695
    %v750 = vpow.pop %v749
    %v751 = vadd.f32 %v750, 1.0
    %v752 = vrcp.pop %v751
    %v753 = vmul.f32 1.0, %v752
    %v754 = vmul.f32 %v739, %v637
    %v755 = vmul.f32 %v739, %v743
    %757 = vrot.lane.b32.xlu0 %v755, 64
    %v758 = vpop.permute.xlu0 %757
    %v760 = vadd.f32 %v754, %v758
    %v761 = vtanh.pop %v760
    %763 = vrot.lane.b32.xlu0 %v761, 64
    %v764 = vpop.permute.xlu0 %763
    %v766 = vmul.f32 %v753, %v764
    %s767 = scalar_lea.vmem [#allocation2], 10
    %768 = vst.msk [vmem:[%s767] sm:$0x3] %vm152, %v766
    %s769 = scalar_lea.vmem %s0, 24
    %v770 = vld [vmem:[%s769] sm:$0xf]
    %v772 = vsel %vm32, %v766, 0
    %774 = vmatprep.subr.mxu0 %v16
    %775 = vmatpush1.msra.mxu0 %v15
    %776 = vmatprep.subr.mxu0 %v18
    %777 = vmatpush1.msra.mxu0 %v17
    %778 = vmatprep.subr.mxu0 %v20
    %779 = vmatpush1.msra.mxu0 %v19
    %780 = vmatprep.subr.mxu0 %v22
    %781 = vmatpush1.msra.mxu0 %v21
    %782 = vmatprep.subr.mxu0 %v24
    %783 = vmatpush1.msra.mxu0 %v23
    %784 = vmatprep.subr.mxu0 %v26
    %785 = vmatpush1.msra.mxu0 %v25
    %786 = vmatprep.subr.mxu0 %v28
    %787 = vmatpush1.msra.mxu0 %v27
    %788 = vmatprep.subr.mxu0 %v30
    %789 = vmatpush1.msra.mxu0 %v29
    %790 = vmatprep.subr.mxu0 0.0
    %791 = vmatpush1.msra.mxu0 0.0
    %792 = vmatprep.subr.mxu0 0.0
    %793 = vmatpush1.msra.mxu0 0.0
    %794 = vmatprep.subr.mxu0 0.0
    %795 = vmatpush1.msra.mxu0 0.0
    %796 = vmatprep.subr.mxu0 0.0
    %797 = vmatpush1.msra.mxu0 0.0
    %798 = vmatprep.subr.mxu0 0.0
    %799 = vmatpush1.msra.mxu0 0.0
    %800 = vmatprep.subr.mxu0 0.0
    %801 = vmatpush1.msra.mxu0 0.0
    %802 = vmatprep.subr.mxu0 0.0
    %803 = vmatpush1.msra.mxu0 0.0
    %804 = vmatprep.subr.mxu0 0.0
    %805 = vmatpush1.msra.mxu0 0.0
    %806 = vmatprep.subr.mxu0 0.0
    %807 = vmatpush1.msra.mxu0 0.0
    %808 = vmatprep.subr.mxu0 0.0
    %809 = vmatpush1.msra.mxu0 0.0
    %810 = vmatprep.subr.mxu0 0.0
    %811 = vmatpush1.msra.mxu0 0.0
    %812 = vmatprep.subr.mxu0 0.0
    %813 = vmatpush1.msra.mxu0 0.0
    %814 = vmatprep.subr.mxu0 0.0
    %815 = vmatpush1.msra.mxu0 0.0
    %816 = vmatprep.subr.mxu0 0.0
    %817 = vmatpush1.msra.mxu0 0.0
    %818 = vmatprep.subr.mxu0 0.0
    %819 = vmatpush1.msra.mxu0 0.0
    %820 = vmatprep.subr.mxu0 0.0
    %821 = vmatpush1.msra.mxu0 0.0
    %822 = vmatprep.subr.mxu0 0.0
    %823 = vmatpush1.msra.mxu0 0.0
    %824 = vmatprep.subr.mxu0 0.0
    %825 = vmatpush1.msra.mxu0 0.0
    %826 = vmatprep.subr.mxu0 0.0
    %827 = vmatpush1.msra.mxu0 0.0
    %828 = vmatprep.subr.mxu0 0.0
    %829 = vmatpush1.msra.mxu0 0.0
    %830 = vmatprep.subr.mxu0 0.0
    %831 = vmatpush1.msra.mxu0 0.0
    %832 = vmatprep.subr.mxu0 0.0
    %833 = vmatpush1.msra.mxu0 0.0
    %834 = vmatprep.subr.mxu0 0.0
    %835 = vmatpush1.msra.mxu0 0.0
    %836 = vmatprep.subr.mxu0 0.0
    %837 = vmatpush1.msra.mxu0 0.0
    %838 = vmatprep.mubr.f32.mxu0 0.0
    %839 = vmatmul.mubr.f32.gmra.mrb[0].mxu0 %v772
    %v840 = vpop.f32.mrb[0].mxu0
    %v841 = vadd.f32 0.0, %v840
    %v842 = vpop.f32.mrb[0].mxu0
    %v843 = vadd.f32 0.0, %v842
    %844 = vdwg.mxu0
    %v847 = vcombine.low %v841, %v843
    %v849 = vunpack.c.l.s4 1983009808
    %v850 = vunpack.c.0.s8 %v849
    %v851 = vlaneseq
    %v852 = vshrl.u32 %v851, 7
    %v853 = vsub.s32 %v850, %v852
    %v854 = vrot.slane %v847, %v853
    %v856 = vadd.f32 %v770, %v854
    %v857 = vxor.u32 %v856, 2147483648
    %v858 = vmul.f32 %v857, 1.442695
    %v859 = vpow.pop %v858
    %v860 = vadd.f32 %v859, 1.0
    %v861 = vrcp.pop %v860
    %v862 = vmul.f32 1.0, %v861
    %v864 = vrot.slane %v856, 2
    %v866 = vtanh.pop %v864
    %867 = vrot.lane.b32.xlu0 %v856, 64
    %v868 = vpop.permute.xlu0 %867
    %v869 = vrot.slane %v868, 2
    %v871 = vxor.u32 %v869, 2147483648
    %v872 = vmul.f32 %v871, 1.442695
    %v873 = vpow.pop %v872
    %v874 = vadd.f32 %v873, 1.0
    %v875 = vrcp.pop %v874
    %v876 = vmul.f32 1.0, %v875
    %v877 = vmul.f32 %v862, %v760
    %v878 = vmul.f32 %v862, %v866
    %880 = vrot.lane.b32.xlu0 %v878, 64
    %v881 = vpop.permute.xlu0 %880
    %v883 = vadd.f32 %v877, %v881
    %v884 = vtanh.pop %v883
    %886 = vrot.lane.b32.xlu0 %v884, 64
    %v887 = vpop.permute.xlu0 %886
    %v889 = vmul.f32 %v876, %v887
    %s890 = scalar_lea.vmem [#allocation2], 12
    %891 = vst.msk [vmem:[%s890] sm:$0x3] %vm152, %v889
    %s892 = scalar_lea.vmem %s0, 28
    %v893 = vld [vmem:[%s892] sm:$0xf]
    %v895 = vsel %vm32, %v889, 0
    %897 = vmatprep.subr.mxu0 %v16
    %898 = vmatpush1.msra.mxu0 %v15
    %899 = vmatprep.subr.mxu0 %v18
    %900 = vmatpush1.msra.mxu0 %v17
    %901 = vmatprep.subr.mxu0 %v20
    %902 = vmatpush1.msra.mxu0 %v19
    %903 = vmatprep.subr.mxu0 %v22
    %904 = vmatpush1.msra.mxu0 %v21
    %905 = vmatprep.subr.mxu0 %v24
    %906 = vmatpush1.msra.mxu0 %v23
    %907 = vmatprep.subr.mxu0 %v26
    %908 = vmatpush1.msra.mxu0 %v25
    %909 = vmatprep.subr.mxu0 %v28
    %910 = vmatpush1.msra.mxu0 %v27
    %911 = vmatprep.subr.mxu0 %v30
    %912 = vmatpush1.msra.mxu0 %v29
    %913 = vmatprep.subr.mxu0 0.0
    %914 = vmatpush1.msra.mxu0 0.0
    %915 = vmatprep.subr.mxu0 0.0
    %916 = vmatpush1.msra.mxu0 0.0
    %917 = vmatprep.subr.mxu0 0.0
    %918 = vmatpush1.msra.mxu0 0.0
    %919 = vmatprep.subr.mxu0 0.0
    %920 = vmatpush1.msra.mxu0 0.0
    %921 = vmatprep.subr.mxu0 0.0
    %922 = vmatpush1.msra.mxu0 0.0
    %923 = vmatprep.subr.mxu0 0.0
    %924 = vmatpush1.msra.mxu0 0.0
    %925 = vmatprep.subr.mxu0 0.0
    %926 = vmatpush1.msra.mxu0 0.0
    %927 = vmatprep.subr.mxu0 0.0
    %928 = vmatpush1.msra.mxu0 0.0
    %929 = vmatprep.subr.mxu0 0.0
    %930 = vmatpush1.msra.mxu0 0.0
    %931 = vmatprep.subr.mxu0 0.0
    %932 = vmatpush1.msra.mxu0 0.0
    %933 = vmatprep.subr.mxu0 0.0
    %934 = vmatpush1.msra.mxu0 0.0
    %935 = vmatprep.subr.mxu0 0.0
    %936 = vmatpush1.msra.mxu0 0.0
    %937 = vmatprep.subr.mxu0 0.0
    %938 = vmatpush1.msra.mxu0 0.0
    %939 = vmatprep.subr.mxu0 0.0
    %940 = vmatpush1.msra.mxu0 0.0
    %941 = vmatprep.subr.mxu0 0.0
    %942 = vmatpush1.msra.mxu0 0.0
    %943 = vmatprep.subr.mxu0 0.0
    %944 = vmatpush1.msra.mxu0 0.0
    %945 = vmatprep.subr.mxu0 0.0
    %946 = vmatpush1.msra.mxu0 0.0
    %947 = vmatprep.subr.mxu0 0.0
    %948 = vmatpush1.msra.mxu0 0.0
    %949 = vmatprep.subr.mxu0 0.0
    %950 = vmatpush1.msra.mxu0 0.0
    %951 = vmatprep.subr.mxu0 0.0
    %952 = vmatpush1.msra.mxu0 0.0
    %953 = vmatprep.subr.mxu0 0.0
    %954 = vmatpush1.msra.mxu0 0.0
    %955 = vmatprep.subr.mxu0 0.0
    %956 = vmatpush1.msra.mxu0 0.0
    %957 = vmatprep.subr.mxu0 0.0
    %958 = vmatpush1.msra.mxu0 0.0
    %959 = vmatprep.subr.mxu0 0.0
    %960 = vmatpush1.msra.mxu0 0.0
    %961 = vmatprep.mubr.f32.mxu0 0.0
    %962 = vmatmul.mubr.f32.gmra.mrb[0].mxu0 %v895
    %v963 = vpop.f32.mrb[0].mxu0
    %v964 = vadd.f32 0.0, %v963
    %v965 = vpop.f32.mrb[0].mxu0
    %v966 = vadd.f32 0.0, %v965
    %967 = vdwg.mxu0
    %v970 = vcombine.low %v964, %v966
    %v972 = vunpack.c.l.s4 1983009808
    %v973 = vunpack.c.0.s8 %v972
    %v974 = vlaneseq
    %v975 = vshrl.u32 %v974, 7
    %v976 = vsub.s32 %v973, %v975
    %v977 = vrot.slane %v970, %v976
    %v979 = vadd.f32 %v893, %v977
    %v980 = vxor.u32 %v979, 2147483648
    %v981 = vmul.f32 %v980, 1.442695
    %v982 = vpow.pop %v981
    %v983 = vadd.f32 %v982, 1.0
    %v984 = vrcp.pop %v983
    %v985 = vmul.f32 1.0, %v984
    %v987 = vrot.slane %v979, 2
    %v989 = vtanh.pop %v987
    %990 = vrot.lane.b32.xlu0 %v979, 64
    %v991 = vpop.permute.xlu0 %990
    %v992 = vrot.slane %v991, 2
    %v994 = vxor.u32 %v992, 2147483648
    %v995 = vmul.f32 %v994, 1.442695
    %v996 = vpow.pop %v995
    %v997 = vadd.f32 %v996, 1.0
    %v998 = vrcp.pop %v997
    %v999 = vmul.f32 1.0, %v998
    %v1000 = vmul.f32 %v985, %v883
    %v1001 = vmul.f32 %v985, %v989
    %1003 = vrot.lane.b32.xlu0 %v1001, 64
    %v1004 = vpop.permute.xlu0 %1003
    %v1006 = vadd.f32 %v1000, %v1004
    %v1007 = vtanh.pop %v1006
    %1009 = vrot.lane.b32.xlu0 %v1007, 64
    %v1010 = vpop.permute.xlu0 %1009
    %v1012 = vmul.f32 %v999, %v1010
    %s1013 = scalar_lea.vmem [#allocation2], 14
    %1014 = vst.msk [vmem:[%s1013] sm:$0x3] %vm152, %v1012
    %1015 = vst.msk [vmem:[%s3] sm:$0x3] %vm152, %v1012
    %v1018 = vunpack.c.l.s4 1983009808
    %v1019 = vunpack.c.0.s8 %v1018
    %v1020 = vlaneseq
    %v1021 = vshrl.u32 %v1020, 7
    %v1022 = vsub.s32 %v1019, %v1021
    %v1023 = vrot.slane %v1006, %v1022
    %1024 = vrot.lane.b32.xlu0 %v1023, 64
    %v1025 = vpop.permute.xlu0 %1024
    %1027 = vst.msk [vmem:[%s4] sm:$0x3] %vm152, %v1025
    // Predicated region
    $region10: #{encoder_forward.3} parent=1 // pred_check
      _
    $region11: #{encoder_forward.3} parent=1 // pred_check_branch
      %1029 = sbr.rel (0) target = $region13
    $region12: #{encoder_forward.3} parent=1 // pred_region
      %s1031 = ssub.s32 256, 256
      %1032 = vsyncadd [#allocation3], %s1031
      %s1033 = sshll.u32 [#allocation2], 4
      %s1034 = int_to_ptr.vmem [resolvable:$true] %s1033
      %1039 = dma.vmem_to_hbm [thread:$0]  %s1034, 256, %s2, [#allocation3], 32, 32, 2
    $region13: #{encoder_forward.3} parent=1 // pred_fallthru
      _
    // Predicated region
    $region14: #{encoder_forward.3} parent=1 // pred_check
      _
    $region15: #{encoder_forward.3} parent=1 // pred_check_branch
      %1041 = sbr.rel (0) target = $region17
    $region16: #{encoder_forward.3} parent=1 // pred_region
      _
    $region17: #{encoder_forward.3} parent=1 // pred_fallthru
      _
    // Predicated region
    $region18: #{encoder_forward.3} parent=1 // pred_check
      _
    $region19: #{encoder_forward.3} parent=1 // pred_check_branch
      %1043 = sbr.rel (0) target = $region21
    $region20: #{encoder_forward.3} parent=1 // pred_region
      _
    $region21: #{encoder_forward.3} parent=1 // pred_fallthru
      _
    // Predicated region
    $region22: #{encoder_forward.3} parent=1 // pred_check
      _
    $region23: #{encoder_forward.3} parent=1 // pred_check_branch
      %1045 = sbr.rel (0) target = $region25
    $region24: #{encoder_forward.3} parent=1 // pred_region
      %1046 = dma.done [#allocation3], 256
    $region25: #{encoder_forward.3} parent=1 // pred_fallthru
      _
    // Predicated region
    $region26: #{encoder_forward.3} parent=1 // pred_check
      _
    $region27: #{encoder_forward.3} parent=1 // pred_check_branch
      %1048 = sbr.rel (0) target = $region29
    $region28: #{encoder_forward.3} parent=1 // pred_region
      _
    $region29: #{encoder_forward.3} parent=1 // pred_fallthru
      _
    // Predicated region
    $region30: #{encoder_forward.3} parent=1 // pred_check
      _
    $region31: #{encoder_forward.3} parent=1 // pred_check_branch
      %1050 = sbr.rel (0) target = $region33
    $region32: #{encoder_forward.3} parent=1 // pred_region
      _
    $region33: #{encoder_forward.3} parent=1 // pred_fallthru
      _
    %1051 = vsyncpa [#allocation3], 1

</llo_original>
